<compile_context>
chip_gen: v7x
topology: tpu7x:2x2x1
jax: 0.10.0
libtpu: 0.0.40
codegen_flags: <defaults>
</compile_context>

<pallas_src>
import functools
import math

import jax
import jax.numpy as jnp
from jax.experimental import pallas as pl
from jax.experimental.pallas import tpu as pltpu

EPS = 1e-5
_INV_SQRT2 = 0.7071067811865475244


def _gelu(x):
    # exact (erf) GELU, matching torch.nn.GELU() default
    return 0.5 * x * (1.0 + jax.lax.erf(x * _INV_SQRT2))


def _layernorm(v, w, b):
    mu = jnp.mean(v, axis=-1, keepdims=True)
    var = jnp.mean(jnp.square(v - mu), axis=-1, keepdims=True)
    return (v - mu) * jax.lax.rsqrt(var + EPS) * w + b


# ----------------------------------------------------------------------------
# Fused kernel: one grid step = one (batch element, layer). The activation is
# carried across the layer axis in a VMEM scratch; the final LN is applied on
# the last layer and written to the output block.
# ----------------------------------------------------------------------------
def _transformer_layer_kernel(
        x_ref,
        alnw_ref, alnb_ref, wqkv_ref, wo_ref, bo_ref,
        flnw_ref, flnb_ref, w1_ref, b1_ref, w2_ref, b2_ref,
        lnw_ref, lnb_ref,
        o_ref,
        xs_ref,                       # VMEM scratch (N, D) f32, carried over l
        *, heads):
    l = pl.program_id(1)
    last = pl.num_programs(1) - 1

    @pl.when(l == 0)
    def _():
        xs_ref[...] = x_ref[0]

    x = xs_ref[...]                                       # (N, D) f32
    n, d = x.shape

    # ---- Attention: pre-LN -> qkv -> softmax(q k^T) v -> out-proj, + residual
    xn = _layernorm(x, alnw_ref[0], alnb_ref[0])
    xn_b = xn.astype(jnp.bfloat16)

    wqkv = wqkv_ref[0]                                    # (3*heads, D, dh) bf16
    xb = jnp.broadcast_to(xn_b[None], (3 * heads, n, d))
    qkv = jax.lax.dot_general(                            # (3*heads, N, dh) f32
        xb, wqkv, (((2,), (1,)), ((0,), (0,))),
        preferred_element_type=jnp.float32).astype(jnp.bfloat16)
    q = qkv[:heads]                                       # scale folded into Wq
    k = qkv[heads:2 * heads]
    v = qkv[2 * heads:]

    dots = jax.lax.dot_general(                           # (heads, N, N) f32
        q, k, (((2,), (2,)), ((0,), (0,))),
        preferred_element_type=jnp.float32)
    dots = dots - jnp.max(dots, axis=-1, keepdims=True)
    e = jnp.exp(dots)
    attn = e * pl.reciprocal(jnp.sum(e, axis=-1, keepdims=True), approx=True)

    hout = jax.lax.dot_general(                           # (heads, N, dh) f32
        attn.astype(jnp.bfloat16), v, (((2,), (1,)), ((0,), (0,))),
        preferred_element_type=jnp.float32)
    part = jax.lax.dot_general(                           # (heads, N, D) f32
        hout.astype(jnp.bfloat16), wo_ref[0],
        (((2,), (1,)), ((0,), (0,))),
        preferred_element_type=jnp.float32)
    x = jnp.sum(part, axis=0) + bo_ref[0] + x             # out-proj + residual

    # ---- FeedForward: pre-LN -> Linear -> GELU -> Linear, + residual
    xn = _layernorm(x, flnw_ref[0], flnb_ref[0])
    h = jnp.dot(xn.astype(jnp.bfloat16), w1_ref[0],
                preferred_element_type=jnp.float32) + b1_ref[0]
    h = _gelu(h)
    x = jnp.dot(h.astype(jnp.bfloat16), w2_ref[0],
                preferred_element_type=jnp.float32) + b2_ref[0] + x

    xs_ref[...] = x

    @pl.when(l == last)
    def _():
        o_ref[0] = _layernorm(x, lnw_ref[...], lnb_ref[...])


# ----------------------------------------------------------------------------
# Host-side parameter prep: fold scale into Wq, reorder per-head weight slabs,
# pre-cast matmul weights to bf16. (Pure layout work, done once outside kernel.)
# ----------------------------------------------------------------------------
def _prep_weights(params, *, heads, dim_head):
    depth, dim, _ = params["w_qkv"].shape
    inner = heads * dim_head
    scale = float(dim_head) ** -0.5

    col_scale = jnp.concatenate([jnp.full((inner,), scale, jnp.float32),
                                 jnp.ones((2 * inner,), jnp.float32)])
    wqkv = params["w_qkv"] * col_scale                    # (depth, D, 3*inner)
    # (depth, D, 3, heads, dh) -> (depth, 3, heads, D, dh) -> (depth, 3h, D, dh)
    wqkv_r = wqkv.reshape(depth, dim, 3, heads, dim_head)
    wqkv_r = jnp.transpose(wqkv_r, (0, 2, 3, 1, 4)).reshape(
        depth, 3 * heads, dim, dim_head).astype(jnp.bfloat16)

    wo_r = params["w_o"].reshape(depth, heads, dim_head, dim).astype(jnp.bfloat16)
    w1 = params["w1"].astype(jnp.bfloat16)
    w2 = params["w2"].astype(jnp.bfloat16)

    per_layer = [params["attn_ln_w"], params["attn_ln_b"], wqkv_r, wo_r,
                 params["b_o"], params["ff_ln_w"], params["ff_ln_b"],
                 w1, params["b1"], w2, params["b2"]]
    final = [params["final_ln_w"], params["final_ln_b"]]
    return per_layer, final


def transformer_forward(x, params, *, heads, dim_head):
    """x: (B, N, D) float32 -> (B, N, D) float32."""
    B, N, D = x.shape
    depth = params["w_qkv"].shape[0]
    per_layer, final = _prep_weights(params, heads=heads, dim_head=dim_head)
    weights = per_layer + final

    def layer_spec(a):
        nd = a.ndim
        return pl.BlockSpec((1,) + a.shape[1:],
                            lambda b, l, _nd=nd: (l,) + (0,) * (_nd - 1))

    def const_spec(a):
        nd = a.ndim
        return pl.BlockSpec(a.shape, lambda b, l, _nd=nd: (0,) * _nd)

    in_specs = ([pl.BlockSpec((1, N, D), lambda b, l: (b, 0, 0))]
                + [layer_spec(a) for a in per_layer]
                + [const_spec(a) for a in final])

    # VMEM budget: double-buffered blocks (x, out, one layer's params) +
    # scratch + headroom for intermediates. Clamp into a safe range.
    def blk_bytes(a, per_layer_stacked):
        shape = a.shape[1:] if per_layer_stacked else a.shape
        return math.prod(shape) * a.dtype.itemsize
    resident = (2 * N * D * 4
                + sum(blk_bytes(a, True) for a in per_layer)
                + sum(blk_bytes(a, False) for a in final))
    vmem_limit = int(min(max(2 * resident + N * D * 4 + (8 << 20), 16 << 20),
                         64 << 20))

    return pl.pallas_call(
        functools.partial(_transformer_layer_kernel, heads=heads),
        grid=(B, depth),
        in_specs=in_specs,
        out_specs=pl.BlockSpec((1, N, D), lambda b, l: (b, 0, 0)),
        out_shape=jax.ShapeDtypeStruct((B, N, D), jnp.float32),
        scratch_shapes=[pltpu.VMEM((N, D), jnp.float32)],
        compiler_params=pltpu.CompilerParams(
            dimension_semantics=("parallel", "arbitrary"),
            vmem_limit_bytes=vmem_limit),
    )(x, *weights)


# ----------------------------------------------------------------------------
# Pure-JAX (f32) reference of the PyTorch module, for a loose correctness check.
# ----------------------------------------------------------------------------
def transformer_reference(x, params, *, heads, dim_head):
    depth = params["w_qkv"].shape[0]
    scale = float(dim_head) ** -0.5
    inner = heads * dim_head
    B, N, D = x.shape
    for l in range(depth):
        xn = _layernorm(x, params["attn_ln_w"][l], params["attn_ln_b"][l])
        qkv = xn @ params["w_qkv"][l]
        q, k, v = jnp.split(qkv, 3, axis=-1)
        sh = lambda t: t.reshape(B, N, heads, dim_head).transpose(0, 2, 1, 3)
        q, k, v = sh(q), sh(k), sh(v)
        dots = jnp.einsum("bhnd,bhmd->bhnm", q, k) * scale
        attn = jax.nn.softmax(dots, axis=-1)
        out = jnp.einsum("bhnm,bhmd->bhnd", attn, v)
        out = out.transpose(0, 2, 1, 3).reshape(B, N, inner)
        x = out @ params["w_o"][l] + params["b_o"][l] + x
        xn = _layernorm(x, params["ff_ln_w"][l], params["ff_ln_b"][l])
        h = _gelu(xn @ params["w1"][l] + params["b1"][l])
        x = h @ params["w2"][l] + params["b2"][l] + x
    return _layernorm(x, params["final_ln_w"], params["final_ln_b"])


# ----------------------------------------------------------------------------
# Deterministic synthetic parameter init (torch-like layouts, matmul (K,N)).
# ----------------------------------------------------------------------------
def init_params(key, *, dim, depth, heads, dim_head, mlp_dim):
    inner = heads * dim_head
    keys = iter(jax.random.split(key, 8 * depth + 4))
    rnd = lambda shape, s=0.05: (
        s * jax.random.normal(next(keys), shape)).astype(jnp.float32)
    ones = lambda shape: jnp.ones(shape, jnp.float32)
    zeros = lambda shape: jnp.zeros(shape, jnp.float32)

    def stack(make):
        return jnp.stack([make() for _ in range(depth)], axis=0)

    return {
        "attn_ln_w": ones((depth, 1, dim)),
        "attn_ln_b": zeros((depth, 1, dim)),
        "w_qkv": stack(lambda: rnd((dim, 3 * inner))),     # to_qkv (no bias)
        "w_o": stack(lambda: rnd((inner, dim))),            # to_out linear
        "b_o": stack(lambda: rnd((1, dim))),
        "ff_ln_w": ones((depth, 1, dim)),
        "ff_ln_b": zeros((depth, 1, dim)),
        "w1": stack(lambda: rnd((dim, mlp_dim))),
        "b1": stack(lambda: rnd((1, mlp_dim))),
        "w2": stack(lambda: rnd((mlp_dim, dim))),
        "b2": stack(lambda: rnd((1, dim))),
        "final_ln_w": ones((1, dim)),
        "final_ln_b": zeros((1, dim)),
    }


if __name__ == "__main__":
    dim, depth, heads, dim_head, mlp_dim = 32, 2, 4, 8, 64
    B, N = 2, 8

    key = jax.random.PRNGKey(0)
    pkey, xkey = jax.random.split(key)
    params = init_params(pkey, dim=dim, depth=depth, heads=heads,
                         dim_head=dim_head, mlp_dim=mlp_dim)
    x = jax.random.normal(xkey, (B, N, dim), dtype=jnp.float32)

    out = transformer_forward(x, params, heads=heads, dim_head=dim_head)
    out = jax.block_until_ready(out)
    assert out.shape == (B, N, dim), out.shape
    assert bool(jnp.all(jnp.isfinite(out)))

    # loose tolerance: kernel runs matmuls with bf16 operands (f32 accumulate)
    ref = transformer_reference(x, params, heads=heads, dim_head=dim_head)
    max_err = float(jnp.max(jnp.abs(out - ref)))
    assert max_err < 1e-1, f"max abs err vs f32 reference: {max_err}"

    print("KERNEL_OK")
</pallas_src>

<mosaic_0001>
module attributes {stable_mosaic.version = 11 : i64} {
  func.func @_transformer_layer_kernel(%arg0: i32, %arg1: i32, %arg2: memref<1x8x32xf32, #tpu.memory_space<vmem>>, %arg3: memref<1x1x32xf32, #tpu.memory_space<vmem>>, %arg4: memref<1x1x32xf32, #tpu.memory_space<vmem>>, %arg5: memref<1x12x32x8xbf16, #tpu.memory_space<vmem>>, %arg6: memref<1x4x8x32xbf16, #tpu.memory_space<vmem>>, %arg7: memref<1x1x32xf32, #tpu.memory_space<vmem>>, %arg8: memref<1x1x32xf32, #tpu.memory_space<vmem>>, %arg9: memref<1x1x32xf32, #tpu.memory_space<vmem>>, %arg10: memref<1x32x64xbf16, #tpu.memory_space<vmem>>, %arg11: memref<1x1x64xf32, #tpu.memory_space<vmem>>, %arg12: memref<1x64x32xbf16, #tpu.memory_space<vmem>>, %arg13: memref<1x1x32xf32, #tpu.memory_space<vmem>>, %arg14: memref<1x32xf32, #tpu.memory_space<vmem>>, %arg15: memref<1x32xf32, #tpu.memory_space<vmem>>, %arg16: memref<1x8x32xf32, #tpu.memory_space<vmem>>, %arg17: memref<8x32xf32, #tpu.memory_space<vmem>>) attributes {dimension_semantics = [#tpu.dimension_semantics<parallel>, #tpu.dimension_semantics<arbitrary>], iteration_bounds = array<i64: 2, 2>, scalar_prefetch = 0 : i64, scratch_operands = 1 : i64, tpu.core_type = #tpu.core_type<tc>, window_params = [{transform_indices = @transform_0, window_bounds = array<i64: 1, 8, 32>}, {transform_indices = @transform_1, window_bounds = array<i64: 1, 1, 32>}, {transform_indices = @transform_2, window_bounds = array<i64: 1, 1, 32>}, {transform_indices = @transform_3, window_bounds = array<i64: 1, 12, 32, 8>}, {transform_indices = @transform_4, window_bounds = array<i64: 1, 4, 8, 32>}, {transform_indices = @transform_5, window_bounds = array<i64: 1, 1, 32>}, {transform_indices = @transform_6, window_bounds = array<i64: 1, 1, 32>}, {transform_indices = @transform_7, window_bounds = array<i64: 1, 1, 32>}, {transform_indices = @transform_8, window_bounds = array<i64: 1, 32, 64>}, {transform_indices = @transform_9, window_bounds = array<i64: 1, 1, 64>}, {transform_indices = @transform_10, window_bounds = array<i64: 1, 64, 32>}, {transform_indices = @transform_11, window_bounds = array<i64: 1, 1, 32>}, {pipeline_mode = #tpu.pipeline_mode<synchronous>, transform_indices = @transform_12, window_bounds = array<i64: 1, 32>}, {pipeline_mode = #tpu.pipeline_mode<synchronous>, transform_indices = @transform_13, window_bounds = array<i64: 1, 32>}, {transform_indices = @transform_14, window_bounds = array<i64: 1, 8, 32>}]} {
    %c0_i32 = arith.constant 0 : i32
    %0 = arith.cmpi eq, %arg1, %c0_i32 : i32
    %1 = arith.extui %0 : i1 to i32
    %c0_i32_0 = arith.constant 0 : i32
    %2 = arith.cmpi ne, %1, %c0_i32_0 : i32
    scf.if %2 {
      %c0_61 = arith.constant 0 : index
      %c0_62 = arith.constant 0 : index
      %c0_63 = arith.constant 0 : index
      %119 = vector.load %arg2[%c0_61, %c0_62, %c0_63] : memref<1x8x32xf32, #tpu.memory_space<vmem>>, vector<1x8x32xf32>
      %120 = vector.shape_cast %119 : vector<1x8x32xf32> to vector<8x32xf32>
      %c0_64 = arith.constant 0 : index
      %c0_65 = arith.constant 0 : index
      %121 = vector.load %arg17[%c0_64, %c0_65] : memref<8x32xf32, #tpu.memory_space<vmem>>, vector<8x32xf32>
      tpu.vector_store %arg17[%c0_64, %c0_65], %120 {strides = array<i32>} : memref<8x32xf32, #tpu.memory_space<vmem>>, vector<8x32xf32>,
    } else {
    }
    %c0 = arith.constant 0 : index
    %c0_1 = arith.constant 0 : index
    %3 = vector.load %arg17[%c0, %c0_1] : memref<8x32xf32, #tpu.memory_space<vmem>>, vector<8x32xf32>
    %c0_2 = arith.constant 0 : index
    %c0_3 = arith.constant 0 : index
    %c0_4 = arith.constant 0 : index
    %4 = vector.load %arg3[%c0_2, %c0_3, %c0_4] : memref<1x1x32xf32, #tpu.memory_space<vmem>>, vector<1x1x32xf32>
    %5 = vector.shape_cast %4 : vector<1x1x32xf32> to vector<1x32xf32>
    %c0_5 = arith.constant 0 : index
    %c0_6 = arith.constant 0 : index
    %c0_7 = arith.constant 0 : index
    %6 = vector.load %arg4[%c0_5, %c0_6, %c0_7] : memref<1x1x32xf32, #tpu.memory_space<vmem>>, vector<1x1x32xf32>
    %7 = vector.shape_cast %6 : vector<1x1x32xf32> to vector<1x32xf32>
    %cst = arith.constant dense<0.000000e+00> : vector<8xf32>
    %8 = vector.multi_reduction <add>, %3, %cst [1] : vector<8x32xf32> to vector<8xf32>
    %9 = vector.shape_cast %8 : vector<8xf32> to vector<8x1xf32>
    %cst_8 = arith.constant 3.200000e+01 : f32
    %10 = vector.broadcast %cst_8 : f32 to vector<8x1xf32>
    %11 = arith.divf %9, %10 : vector<8x1xf32>
    %12 = vector.broadcast %11 : vector<8x1xf32> to vector<8x32xf32>
    %13 = arith.subf %3, %12 : vector<8x32xf32>
    %14 = arith.mulf %13, %13 : vector<8x32xf32>
    %cst_9 = arith.constant dense<0.000000e+00> : vector<8xf32>
    %15 = vector.multi_reduction <add>, %14, %cst_9 [1] : vector<8x32xf32> to vector<8xf32>
    %16 = vector.shape_cast %15 : vector<8xf32> to vector<8x1xf32>
    %cst_10 = arith.constant 3.200000e+01 : f32
    %17 = vector.broadcast %cst_10 : f32 to vector<8x1xf32>
    %18 = arith.divf %16, %17 : vector<8x1xf32>
    %19 = vector.broadcast %11 : vector<8x1xf32> to vector<8x32xf32>
    %20 = arith.subf %3, %19 : vector<8x32xf32>
    %cst_11 = arith.constant 9.99999974E-6 : f32
    %21 = vector.broadcast %cst_11 : f32 to vector<8x1xf32>
    %22 = arith.addf %18, %21 : vector<8x1xf32>
    %23 = math.rsqrt %22 : vector<8x1xf32>
    %24 = vector.broadcast %23 : vector<8x1xf32> to vector<8x32xf32>
    %25 = arith.mulf %20, %24 : vector<8x32xf32>
    %26 = vector.broadcast %5 : vector<1x32xf32> to vector<8x32xf32>
    %27 = arith.mulf %25, %26 : vector<8x32xf32>
    %28 = vector.broadcast %7 : vector<1x32xf32> to vector<8x32xf32>
    %29 = arith.addf %27, %28 : vector<8x32xf32>
    %30 = arith.truncf %29 : vector<8x32xf32> to vector<8x32xbf16>
    %c0_12 = arith.constant 0 : index
    %c0_13 = arith.constant 0 : index
    %c0_14 = arith.constant 0 : index
    %c0_15 = arith.constant 0 : index
    %31 = vector.load %arg5[%c0_12, %c0_13, %c0_14, %c0_15] : memref<1x12x32x8xbf16, #tpu.memory_space<vmem>>, vector<1x12x32x8xbf16>
    %32 = vector.shape_cast %31 : vector<1x12x32x8xbf16> to vector<12x32x8xbf16>
    %33 = vector.shape_cast %30 : vector<8x32xbf16> to vector<1x8x32xbf16>
    %34 = vector.shape_cast %33 : vector<1x8x32xbf16> to vector<1x8x32xbf16>
    %35 = vector.broadcast %34 : vector<1x8x32xbf16> to vector<12x8x32xbf16>
    %cst_16 = arith.constant dense<0.000000e+00> : vector<12x8x8xf32>
    %36 = tpu.matmul %35, %32, %cst_16 {dimension_numbers = #tpu.dot_dimension_numbers<[2], [1], [1], [2], [0, 0, 0, 1, 1, 2], [0], [0]>} : vector<12x8x32xbf16>, vector<12x32x8xbf16>, vector<12x8x8xf32> -> vector<12x8x8xf32>
    %37 = arith.truncf %36 : vector<12x8x8xf32> to vector<12x8x8xbf16>
    %38 = vector.extract_strided_slice %37 {offsets = [0, 0, 0], sizes = [4, 8, 8], strides = [1, 1, 1]} : vector<12x8x8xbf16> to vector<4x8x8xbf16>
    %39 = vector.extract_strided_slice %37 {offsets = [4, 0, 0], sizes = [4, 8, 8], strides = [1, 1, 1]} : vector<12x8x8xbf16> to vector<4x8x8xbf16>
    %40 = vector.extract_strided_slice %37 {offsets = [8, 0, 0], sizes = [4, 8, 8], strides = [1, 1, 1]} : vector<12x8x8xbf16> to vector<4x8x8xbf16>
    %cst_17 = arith.constant dense<0.000000e+00> : vector<4x8x8xf32>
    %41 = tpu.matmul %38, %39, %cst_17 {dimension_numbers = #tpu.dot_dimension_numbers<[2], [2], [1], [1], [0, 0, 0, 1, 1, 1], [0], [0]>} : vector<4x8x8xbf16>, vector<4x8x8xbf16>, vector<4x8x8xf32> -> vector<4x8x8xf32>
    %cst_18 = arith.constant dense<0xFF800000> : vector<4x8xf32>
    %42 = vector.multi_reduction <maximumf>, %41, %cst_18 [2] : vector<4x8x8xf32> to vector<4x8xf32>
    %43 = vector.shape_cast %42 : vector<4x8xf32> to vector<4x8x1xf32>
    %44 = vector.broadcast %43 : vector<4x8x1xf32> to vector<4x8x8xf32>
    %45 = arith.subf %41, %44 : vector<4x8x8xf32>
    %46 = math.exp %45 : vector<4x8x8xf32>
    %cst_19 = arith.constant dense<0.000000e+00> : vector<4x8xf32>
    %47 = vector.multi_reduction <add>, %46, %cst_19 [2] : vector<4x8x8xf32> to vector<4x8xf32>
    %48 = vector.shape_cast %47 : vector<4x8xf32> to vector<4x8x1xf32>
    %49 = tpu.reciprocal %48 {approx = true} : vector<4x8x1xf32> -> vector<4x8x1xf32>
    %50 = vector.broadcast %49 : vector<4x8x1xf32> to vector<4x8x8xf32>
    %51 = arith.mulf %46, %50 : vector<4x8x8xf32>
    %52 = arith.truncf %51 : vector<4x8x8xf32> to vector<4x8x8xbf16>
    %cst_20 = arith.constant dense<0.000000e+00> : vector<4x8x8xf32>
    %53 = tpu.matmul %52, %40, %cst_20 {dimension_numbers = #tpu.dot_dimension_numbers<[2], [1], [1], [2], [0, 0, 0, 1, 1, 2], [0], [0]>} : vector<4x8x8xbf16>, vector<4x8x8xbf16>, vector<4x8x8xf32> -> vector<4x8x8xf32>
    %54 = arith.truncf %53 : vector<4x8x8xf32> to vector<4x8x8xbf16>
    %c0_21 = arith.constant 0 : index
    %c0_22 = arith.constant 0 : index
    %c0_23 = arith.constant 0 : index
    %c0_24 = arith.constant 0 : index
    %55 = vector.load %arg6[%c0_21, %c0_22, %c0_23, %c0_24] : memref<1x4x8x32xbf16, #tpu.memory_space<vmem>>, vector<1x4x8x32xbf16>
    %56 = vector.shape_cast %55 : vector<1x4x8x32xbf16> to vector<4x8x32xbf16>
    %cst_25 = arith.constant dense<0.000000e+00> : vector<4x8x32xf32>
    %57 = tpu.matmul %54, %56, %cst_25 {dimension_numbers = #tpu.dot_dimension_numbers<[2], [1], [1], [2], [0, 0, 0, 1, 1, 2], [0], [0]>} : vector<4x8x8xbf16>, vector<4x8x32xbf16>, vector<4x8x32xf32> -> vector<4x8x32xf32>
    %cst_26 = arith.constant dense<0.000000e+00> : vector<8x32xf32>
    %58 = vector.multi_reduction <add>, %57, %cst_26 [0] : vector<4x8x32xf32> to vector<8x32xf32>
    %c0_27 = arith.constant 0 : index
    %c0_28 = arith.constant 0 : index
    %c0_29 = arith.constant 0 : index
    %59 = vector.load %arg7[%c0_27, %c0_28, %c0_29] : memref<1x1x32xf32, #tpu.memory_space<vmem>>, vector<1x1x32xf32>
    %60 = vector.shape_cast %59 : vector<1x1x32xf32> to vector<1x32xf32>
    %61 = vector.broadcast %60 : vector<1x32xf32> to vector<8x32xf32>
    %62 = arith.addf %58, %61 : vector<8x32xf32>
    %63 = arith.addf %62, %3 : vector<8x32xf32>
    %c0_30 = arith.constant 0 : index
    %c0_31 = arith.constant 0 : index
    %c0_32 = arith.constant 0 : index
    %64 = vector.load %arg8[%c0_30, %c0_31, %c0_32] : memref<1x1x32xf32, #tpu.memory_space<vmem>>, vector<1x1x32xf32>
    %65 = vector.shape_cast %64 : vector<1x1x32xf32> to vector<1x32xf32>
    %c0_33 = arith.constant 0 : index
    %c0_34 = arith.constant 0 : index
    %c0_35 = arith.constant 0 : index
    %66 = vector.load %arg9[%c0_33, %c0_34, %c0_35] : memref<1x1x32xf32, #tpu.memory_space<vmem>>, vector<1x1x32xf32>
    %67 = vector.shape_cast %66 : vector<1x1x32xf32> to vector<1x32xf32>
    %cst_36 = arith.constant dense<0.000000e+00> : vector<8xf32>
    %68 = vector.multi_reduction <add>, %63, %cst_36 [1] : vector<8x32xf32> to vector<8xf32>
    %69 = vector.shape_cast %68 : vector<8xf32> to vector<8x1xf32>
    %cst_37 = arith.constant 3.200000e+01 : f32
    %70 = vector.broadcast %cst_37 : f32 to vector<8x1xf32>
    %71 = arith.divf %69, %70 : vector<8x1xf32>
    %72 = vector.broadcast %71 : vector<8x1xf32> to vector<8x32xf32>
    %73 = arith.subf %63, %72 : vector<8x32xf32>
    %74 = arith.mulf %73, %73 : vector<8x32xf32>
    %cst_38 = arith.constant dense<0.000000e+00> : vector<8xf32>
    %75 = vector.multi_reduction <add>, %74, %cst_38 [1] : vector<8x32xf32> to vector<8xf32>
    %76 = vector.shape_cast %75 : vector<8xf32> to vector<8x1xf32>
    %cst_39 = arith.constant 3.200000e+01 : f32
    %77 = vector.broadcast %cst_39 : f32 to vector<8x1xf32>
    %78 = arith.divf %76, %77 : vector<8x1xf32>
    %79 = vector.broadcast %71 : vector<8x1xf32> to vector<8x32xf32>
    %80 = arith.subf %63, %79 : vector<8x32xf32>
    %cst_40 = arith.constant 9.99999974E-6 : f32
    %81 = vector.broadcast %cst_40 : f32 to vector<8x1xf32>
    %82 = arith.addf %78, %81 : vector<8x1xf32>
    %83 = math.rsqrt %82 : vector<8x1xf32>
    %84 = vector.broadcast %83 : vector<8x1xf32> to vector<8x32xf32>
    %85 = arith.mulf %80, %84 : vector<8x32xf32>
    %86 = vector.broadcast %65 : vector<1x32xf32> to vector<8x32xf32>
    %87 = arith.mulf %85, %86 : vector<8x32xf32>
    %88 = vector.broadcast %67 : vector<1x32xf32> to vector<8x32xf32>
    %89 = arith.addf %87, %88 : vector<8x32xf32>
    %90 = arith.truncf %89 : vector<8x32xf32> to vector<8x32xbf16>
    %c0_41 = arith.constant 0 : index
    %c0_42 = arith.constant 0 : index
    %c0_43 = arith.constant 0 : index
    %91 = vector.load %arg10[%c0_41, %c0_42, %c0_43] : memref<1x32x64xbf16, #tpu.memory_space<vmem>>, vector<1x32x64xbf16>
    %92 = vector.shape_cast %91 : vector<1x32x64xbf16> to vector<32x64xbf16>
    %cst_44 = arith.constant dense<0.000000e+00> : vector<8x64xf32>
    %93 = tpu.matmul %90, %92, %cst_44 {dimension_numbers = #tpu.dot_dimension_numbers<[1], [0], [0], [1], [0, 0, 1, 1], [], []>} : vector<8x32xbf16>, vector<32x64xbf16>, vector<8x64xf32> -> vector<8x64xf32>
    %c0_45 = arith.constant 0 : index
    %c0_46 = arith.constant 0 : index
    %c0_47 = arith.constant 0 : index
    %94 = vector.load %arg11[%c0_45, %c0_46, %c0_47] : memref<1x1x64xf32, #tpu.memory_space<vmem>>, vector<1x1x64xf32>
    %95 = vector.shape_cast %94 : vector<1x1x64xf32> to vector<1x64xf32>
    %96 = vector.broadcast %95 : vector<1x64xf32> to vector<8x64xf32>
    %97 = arith.addf %93, %96 : vector<8x64xf32>
    %cst_48 = arith.constant 5.000000e-01 : f32
    %98 = vector.broadcast %cst_48 : f32 to vector<8x64xf32>
    %99 = arith.mulf %98, %97 : vector<8x64xf32>
    %cst_49 = arith.constant 0.707106769 : f32
    %100 = vector.broadcast %cst_49 : f32 to vector<8x64xf32>
    %101 = arith.mulf %97, %100 : vector<8x64xf32>
    %102 = math.erf %101 : vector<8x64xf32>
    %cst_50 = arith.constant 1.000000e+00 : f32
    %103 = vector.broadcast %cst_50 : f32 to vector<8x64xf32>
    %104 = arith.addf %103, %102 : vector<8x64xf32>
    %105 = arith.mulf %99, %104 : vector<8x64xf32>
    %106 = arith.truncf %105 : vector<8x64xf32> to vector<8x64xbf16>
    %c0_51 = arith.constant 0 : index
    %c0_52 = arith.constant 0 : index
    %c0_53 = arith.constant 0 : index
    %107 = vector.load %arg12[%c0_51, %c0_52, %c0_53] : memref<1x64x32xbf16, #tpu.memory_space<vmem>>, vector<1x64x32xbf16>
    %108 = vector.shape_cast %107 : vector<1x64x32xbf16> to vector<64x32xbf16>
    %cst_54 = arith.constant dense<0.000000e+00> : vector<8x32xf32>
    %109 = tpu.matmul %106, %108, %cst_54 {dimension_numbers = #tpu.dot_dimension_numbers<[1], [0], [0], [1], [0, 0, 1, 1], [], []>} : vector<8x64xbf16>, vector<64x32xbf16>, vector<8x32xf32> -> vector<8x32xf32>
    %c0_55 = arith.constant 0 : index
    %c0_56 = arith.constant 0 : index
    %c0_57 = arith.constant 0 : index
    %110 = vector.load %arg13[%c0_55, %c0_56, %c0_57] : memref<1x1x32xf32, #tpu.memory_space<vmem>>, vector<1x1x32xf32>
    %111 = vector.shape_cast %110 : vector<1x1x32xf32> to vector<1x32xf32>
    %112 = vector.broadcast %111 : vector<1x32xf32> to vector<8x32xf32>
    %113 = arith.addf %109, %112 : vector<8x32xf32>
    %114 = arith.addf %113, %63 : vector<8x32xf32>
    %c0_58 = arith.constant 0 : index
    %c0_59 = arith.constant 0 : index
    %115 = vector.load %arg17[%c0_58, %c0_59] : memref<8x32xf32, #tpu.memory_space<vmem>>, vector<8x32xf32>
    tpu.vector_store %arg17[%c0_58, %c0_59], %114 {strides = array<i32>} : memref<8x32xf32, #tpu.memory_space<vmem>>, vector<8x32xf32>,
    %c1_i32 = arith.constant 1 : i32
    %116 = arith.cmpi eq, %arg1, %c1_i32 : i32
    %117 = arith.extui %116 : i1 to i32
    %c0_i32_60 = arith.constant 0 : i32
    %118 = arith.cmpi ne, %117, %c0_i32_60 : i32
    scf.if %118 {
      %c0_61 = arith.constant 0 : index
      %c0_62 = arith.constant 0 : index
      %119 = vector.load %arg14[%c0_61, %c0_62] : memref<1x32xf32, #tpu.memory_space<vmem>>, vector<1x32xf32>
      %c0_63 = arith.constant 0 : index
      %c0_64 = arith.constant 0 : index
      %120 = vector.load %arg15[%c0_63, %c0_64] : memref<1x32xf32, #tpu.memory_space<vmem>>, vector<1x32xf32>
      %cst_65 = arith.constant dense<0.000000e+00> : vector<8xf32>
      %121 = vector.multi_reduction <add>, %114, %cst_65 [1] : vector<8x32xf32> to vector<8xf32>
      %122 = vector.shape_cast %121 : vector<8xf32> to vector<8x1xf32>
      %cst_66 = arith.constant 3.200000e+01 : f32
      %123 = vector.broadcast %cst_66 : f32 to vector<8x1xf32>
      %124 = arith.divf %122, %123 : vector<8x1xf32>
      %125 = vector.broadcast %124 : vector<8x1xf32> to vector<8x32xf32>
      %126 = arith.subf %114, %125 : vector<8x32xf32>
      %127 = arith.mulf %126, %126 : vector<8x32xf32>
      %cst_67 = arith.constant dense<0.000000e+00> : vector<8xf32>
      %128 = vector.multi_reduction <add>, %127, %cst_67 [1] : vector<8x32xf32> to vector<8xf32>
      %129 = vector.shape_cast %128 : vector<8xf32> to vector<8x1xf32>
      %cst_68 = arith.constant 3.200000e+01 : f32
      %130 = vector.broadcast %cst_68 : f32 to vector<8x1xf32>
      %131 = arith.divf %129, %130 : vector<8x1xf32>
      %132 = vector.broadcast %124 : vector<8x1xf32> to vector<8x32xf32>
      %133 = arith.subf %114, %132 : vector<8x32xf32>
      %cst_69 = arith.constant 9.99999974E-6 : f32
      %134 = vector.broadcast %cst_69 : f32 to vector<8x1xf32>
      %135 = arith.addf %131, %134 : vector<8x1xf32>
      %136 = math.rsqrt %135 : vector<8x1xf32>
      %137 = vector.broadcast %136 : vector<8x1xf32> to vector<8x32xf32>
      %138 = arith.mulf %133, %137 : vector<8x32xf32>
      %139 = vector.broadcast %119 : vector<1x32xf32> to vector<8x32xf32>
      %140 = arith.mulf %138, %139 : vector<8x32xf32>
      %141 = vector.broadcast %120 : vector<1x32xf32> to vector<8x32xf32>
      %142 = arith.addf %140, %141 : vector<8x32xf32>
      %c0_70 = arith.constant 0 : index
      %c0_71 = arith.constant 0 : index
      %c0_72 = arith.constant 0 : index
      %143 = vector.load %arg16[%c0_70, %c0_71, %c0_72] : memref<1x8x32xf32, #tpu.memory_space<vmem>>, vector<1x8x32xf32>
      %144 = vector.shape_cast %143 : vector<1x8x32xf32> to vector<8x32xf32>
      %145 = vector.shape_cast %142 : vector<8x32xf32> to vector<1x8x32xf32>
      tpu.vector_store %arg16[%c0_70, %c0_71, %c0_72], %145 {strides = array<i32>} : memref<1x8x32xf32, #tpu.memory_space<vmem>>, vector<1x8x32xf32>,
    } else {
    }
    return
  }
  func.func @transform_0(%arg0: i32, %arg1: i32) -> (i32, i32, i32) {
    %c0_i32 = arith.constant 0 : i32
    %c0_i32_0 = arith.constant 0 : i32
    %c0_i32_1 = arith.constant 0 : i32
    return %arg0, %c0_i32, %c0_i32_0 : i32, i32, i32
  }
  func.func @transform_1(%arg0: i32, %arg1: i32) -> (i32, i32, i32) {
    %c0_i32 = arith.constant 0 : i32
    %c0_i32_0 = arith.constant 0 : i32
    %c0_i32_1 = arith.constant 0 : i32
    return %arg1, %c0_i32, %c0_i32_0 : i32, i32, i32
  }
  func.func @transform_2(%arg0: i32, %arg1: i32) -> (i32, i32, i32) {
    %c0_i32 = arith.constant 0 : i32
    %c0_i32_0 = arith.constant 0 : i32
    %c0_i32_1 = arith.constant 0 : i32
    return %arg1, %c0_i32, %c0_i32_0 : i32, i32, i32
  }
  func.func @transform_3(%arg0: i32, %arg1: i32) -> (i32, i32, i32, i32) {
    %c0_i32 = arith.constant 0 : i32
    %c0_i32_0 = arith.constant 0 : i32
    %c0_i32_1 = arith.constant 0 : i32
    %c0_i32_2 = arith.constant 0 : i32
    return %arg1, %c0_i32, %c0_i32_0, %c0_i32_1 : i32, i32, i32, i32
  }
  func.func @transform_4(%arg0: i32, %arg1: i32) -> (i32, i32, i32, i32) {
    %c0_i32 = arith.constant 0 : i32
    %c0_i32_0 = arith.constant 0 : i32
    %c0_i32_1 = arith.constant 0 : i32
    %c0_i32_2 = arith.constant 0 : i32
    return %arg1, %c0_i32, %c0_i32_0, %c0_i32_1 : i32, i32, i32, i32
  }
  func.func @transform_5(%arg0: i32, %arg1: i32) -> (i32, i32, i32) {
    %c0_i32 = arith.constant 0 : i32
    %c0_i32_0 = arith.constant 0 : i32
    %c0_i32_1 = arith.constant 0 : i32
    return %arg1, %c0_i32, %c0_i32_0 : i32, i32, i32
  }
  func.func @transform_6(%arg0: i32, %arg1: i32) -> (i32, i32, i32) {
    %c0_i32 = arith.constant 0 : i32
    %c0_i32_0 = arith.constant 0 : i32
    %c0_i32_1 = arith.constant 0 : i32
    return %arg1, %c0_i32, %c0_i32_0 : i32, i32, i32
  }
  func.func @transform_7(%arg0: i32, %arg1: i32) -> (i32, i32, i32) {
    %c0_i32 = arith.constant 0 : i32
    %c0_i32_0 = arith.constant 0 : i32
    %c0_i32_1 = arith.constant 0 : i32
    return %arg1, %c0_i32, %c0_i32_0 : i32, i32, i32
  }
  func.func @transform_8(%arg0: i32, %arg1: i32) -> (i32, i32, i32) {
    %c0_i32 = arith.constant 0 : i32
    %c0_i32_0 = arith.constant 0 : i32
    %c0_i32_1 = arith.constant 0 : i32
    return %arg1, %c0_i32, %c0_i32_0 : i32, i32, i32
  }
  func.func @transform_9(%arg0: i32, %arg1: i32) -> (i32, i32, i32) {
    %c0_i32 = arith.constant 0 : i32
    %c0_i32_0 = arith.constant 0 : i32
    %c0_i32_1 = arith.constant 0 : i32
    return %arg1, %c0_i32, %c0_i32_0 : i32, i32, i32
  }
  func.func @transform_10(%arg0: i32, %arg1: i32) -> (i32, i32, i32) {
    %c0_i32 = arith.constant 0 : i32
    %c0_i32_0 = arith.constant 0 : i32
    %c0_i32_1 = arith.constant 0 : i32
    return %arg1, %c0_i32, %c0_i32_0 : i32, i32, i32
  }
  func.func @transform_11(%arg0: i32, %arg1: i32) -> (i32, i32, i32) {
    %c0_i32 = arith.constant 0 : i32
    %c0_i32_0 = arith.constant 0 : i32
    %c0_i32_1 = arith.constant 0 : i32
    return %arg1, %c0_i32, %c0_i32_0 : i32, i32, i32
  }
  func.func @transform_12(%arg0: i32, %arg1: i32) -> (i32, i32) {
    %c0_i32 = arith.constant 0 : i32
    %c0_i32_0 = arith.constant 0 : i32
    %c0_i32_1 = arith.constant 0 : i32
    return %c0_i32, %c0_i32_0 : i32, i32
  }
  func.func @transform_13(%arg0: i32, %arg1: i32) -> (i32, i32) {
    %c0_i32 = arith.constant 0 : i32
    %c0_i32_0 = arith.constant 0 : i32
    %c0_i32_1 = arith.constant 0 : i32
    return %c0_i32, %c0_i32_0 : i32, i32
  }
  func.func @transform_14(%arg0: i32, %arg1: i32) -> (i32, i32, i32) {
    %c0_i32 = arith.constant 0 : i32
    %c0_i32_0 = arith.constant 0 : i32
    %c0_i32_1 = arith.constant 0 : i32
    return %arg0, %c0_i32, %c0_i32_0 : i32, i32, i32
  }
}

</mosaic_0001>

<llo_original>
// kernel: tpu_custom_call.1
$region0: #{tpu_custom_call.1}
  #allocation0 [shape = 'u32[]', space=smem, size = 0x4, offset = 0x4, fixed_abs, tag = 'smem constant byte address 0x4 - core index']
  #allocation1 [shape = 'u32[144,128]{1,0:T(1,128)}', space=vmem, size = 0x12000, scoped, tag = 'internal scratch']
  #allocation2 [shape = 'f32[8,32]{1,0:T(8,128)}', space=vmem, size = 0x1000, scoped, tag = 'scratch operand']
  %s0 = inlined_call_operand.vmem [shape: f32[2,8,32], index: 0, kind: input, shape index: {}]
  %s1 = inlined_call_operand.vmem [shape: f32[2,1,32], index: 1, kind: input, shape index: {}]
  %s2 = inlined_call_operand.vmem [shape: f32[2,1,32], index: 2, kind: input, shape index: {}]
  %s3 = inlined_call_operand.vmem [shape: bf16[2,12,32,8], index: 3, kind: input, shape index: {}]
  %s4 = inlined_call_operand.vmem [shape: bf16[2,4,8,32], index: 4, kind: input, shape index: {}]
  %s5 = inlined_call_operand.vmem [shape: f32[2,1,32], index: 5, kind: input, shape index: {}]
  %s6 = inlined_call_operand.vmem [shape: f32[2,1,32], index: 6, kind: input, shape index: {}]
  %s7 = inlined_call_operand.vmem [shape: f32[2,1,32], index: 7, kind: input, shape index: {}]
  %s8 = inlined_call_operand.vmem [shape: bf16[2,32,64], index: 8, kind: input, shape index: {}]
  %s9 = inlined_call_operand.vmem [shape: f32[2,1,64], index: 9, kind: input, shape index: {}]
  %s10 = inlined_call_operand.vmem [shape: bf16[2,64,32], index: 10, kind: input, shape index: {}]
  %s11 = inlined_call_operand.vmem [shape: f32[2,1,32], index: 11, kind: input, shape index: {}]
  %s12 = inlined_call_operand.vmem [shape: f32[1,32], index: 12, kind: input, shape index: {}]
  %s13 = inlined_call_operand.vmem [shape: f32[1,32], index: 13, kind: input, shape index: {}]
  %s14 = inlined_call_operand.hbm [shape: f32[2,8,32], index: 14, kind: output, shape index: {}]
  %s15 = sld [smem:[#allocation0]]
  $region97: #{tpu_custom_call.1} parent=0
    _
  %s17 = ssub.s32 1, %s15
  %s18 = scalar_select 0, %s17, %s15
  $region1: #{tpu_custom_call.1} parent=0
    #allocation3 [shape = 'u8[8192]{0}', space=vmem, size = 0x2000, scoped, tag = 'output window, operand 0']
    #allocation4 [shape = 's32[2]{0}', space=sflag, size = 0x8, scoped, tag = 'scoped memory for tpu_custom_call.1']
    %19 = vsyncpa [#allocation4], 0
    %s20 = scalar_lea.sflag [#allocation4], 1
    %21 = vsyncpa %s20, 0
    loop: start=0, step=1, limit=6
    $region2: #{tpu_custom_call.1} parent=1 // loop_pre_header
      _
    $region3: #{tpu_custom_call.1} parent=1 // loop_header
      %s23 = sphi 0, %s27
      %p24 = scmp.ge.s32.totalorder %s23, 6
      %s30 = sphi 0, %s42
      %s31 = sphi 0, %s38
      %s32 = sphi 0, %s30
      %s33 = sphi 0, %s31
      %s34 = sphi 0, %s32
      %s35 = sphi 0, %s33
      %s45 = sphi 0, %s47
      %s48 = sphi 0, %s45
      %s49 = sphi 0, %s48
      %s65 = sphi 0, %s49
      %s71 = sphi 0, %s73
      %s74 = sphi 0, %s71
      %s75 = sphi 0, %s74
      %s91 = sphi 0, %s75
      %s97 = sphi 0, %s99
      %s100 = sphi 0, %s97
      %s101 = sphi 0, %s100
      %s117 = sphi 0, %s101
      %s123 = sphi 0, %s125
      %s126 = sphi 0, %s123
      %s127 = sphi 0, %s126
      %s143 = sphi 0, %s127
      %s149 = sphi 0, %s151
      %s152 = sphi 0, %s149
      %s153 = sphi 0, %s152
      %s169 = sphi 0, %s153
      %s175 = sphi 0, %s177
      %s178 = sphi 0, %s175
      %s179 = sphi 0, %s178
      %s195 = sphi 0, %s179
      %s201 = sphi 0, %s203
      %s204 = sphi 0, %s201
      %s205 = sphi 0, %s204
      %s221 = sphi 0, %s205
      %s227 = sphi 0, %s229
      %s230 = sphi 0, %s227
      %s231 = sphi 0, %s230
      %s247 = sphi 0, %s231
      %s253 = sphi 0, %s255
      %s256 = sphi 0, %s253
      %s257 = sphi 0, %s256
      %s273 = sphi 0, %s257
      %s279 = sphi 0, %s281
      %s282 = sphi 0, %s279
      %s283 = sphi 0, %s282
      %s299 = sphi 0, %s283
      %s305 = sphi 0, %s307
      %s308 = sphi 0, %s305
      %s309 = sphi 0, %s308
      %s325 = sphi 0, %s309
      %s331 = sphi 0, %s333
      %s334 = sphi 0, %s331
      %s335 = sphi 0, %s334
      %s351 = sphi 0, %s335
      %s355 = sphi 0, %s355
      %s357 = sphi 0, %s355
      %s358 = sphi 0, %s357
      %s372 = sphi 0, %s358
      %s376 = sphi 0, %s376
      %s378 = sphi 0, %s376
      %s379 = sphi 0, %s378
      %s393 = sphi 0, %s379
      %s399 = sphi 0, %s401
      %s402 = sphi 0, %s399
      %s403 = sphi 0, %s402
      %s419 = sphi 0, %s403
    $region4: #{tpu_custom_call.1} parent=1 // loop_header_branch
      %26 = sbr.rel (%p24) target = $region8
    $region5: #{tpu_custom_call.1} parent=1 // loop_body
      %s28 = ssub.s32 %s23, 1
      %s29 = ssub.s32 %s23, 2
      %s36 = sadd.s32 1, %s31
      %p37 = scmp.ge.s32.totalorder %s36, 2
      %s38 = scalar_select %p37, 0, %s36
      %s39 = sadd.s32 1, %s30
      %s40 = scalar_select %p37, %s39, %s30
      %p41 = scmp.ge.s32.totalorder %s40, 2
      %s42 = scalar_select %p41, 0, %s40
      %s43 = ssub.s32 %s30, %s42
      %p44 = scmp.eq.s32.totalorder %s43, 0
      %s46 = sadd.s32 %s45, 1
      %s47 = scalar_select %p44, %s45, %s46
      %p50 = pneg %p44
      %p51 = scmp.eq.s32.totalorder %s23, 3
      %p52 = por %p50, %p51
      %p53 = scmp.ne.s32.totalorder %s45, %s48
      %p54 = scmp.eq.s32.totalorder %s23, 0
      %p55 = por %p53, %p54
      %p56 = scmp.ne.s32.totalorder %s45, %s48
      %p57 = scmp.eq.s32.totalorder %s28, 3
      %p58 = por %p56, %p57
      %p59 = scmp.ne.s32.totalorder %s48, %s49
      %p60 = scmp.eq.s32.totalorder %s28, 0
      %p61 = por %p59, %p60
      %p62 = scmp.ne.s32.totalorder %s48, %s49
      %p63 = scmp.eq.s32.totalorder %s29, 3
      %p64 = por %p62, %p63
      %p66 = scmp.ne.s32.totalorder %s49, %s65
      %p67 = scmp.eq.s32.totalorder %s29, 0
      %p68 = por %p66, %p67
      %s69 = ssub.s32 %s31, %s38
      %p70 = scmp.eq.s32.totalorder %s69, 0
      %s72 = sadd.s32 %s71, 1
      %s73 = scalar_select %p70, %s71, %s72
      %p76 = pneg %p70
      %p77 = scmp.eq.s32.totalorder %s23, 3
      %p78 = por %p76, %p77
      %p79 = scmp.ne.s32.totalorder %s71, %s74
      %p80 = scmp.eq.s32.totalorder %s23, 0
      %p81 = por %p79, %p80
      %p82 = scmp.ne.s32.totalorder %s71, %s74
      %p83 = scmp.eq.s32.totalorder %s28, 3
      %p84 = por %p82, %p83
      %p85 = scmp.ne.s32.totalorder %s74, %s75
      %p86 = scmp.eq.s32.totalorder %s28, 0
      %p87 = por %p85, %p86
      %p88 = scmp.ne.s32.totalorder %s74, %s75
      %p89 = scmp.eq.s32.totalorder %s29, 3
      %p90 = por %p88, %p89
      %p92 = scmp.ne.s32.totalorder %s75, %s91
      %p93 = scmp.eq.s32.totalorder %s29, 0
      %p94 = por %p92, %p93
      %s95 = ssub.s32 %s31, %s38
      %p96 = scmp.eq.s32.totalorder %s95, 0
      %s98 = sadd.s32 %s97, 1
      %s99 = scalar_select %p96, %s97, %s98
      %p102 = pneg %p96
      %p103 = scmp.eq.s32.totalorder %s23, 3
      %p104 = por %p102, %p103
      %p105 = scmp.ne.s32.totalorder %s97, %s100
      %p106 = scmp.eq.s32.totalorder %s23, 0
      %p107 = por %p105, %p106
      %p108 = scmp.ne.s32.totalorder %s97, %s100
      %p109 = scmp.eq.s32.totalorder %s28, 3
      %p110 = por %p108, %p109
      %p111 = scmp.ne.s32.totalorder %s100, %s101
      %p112 = scmp.eq.s32.totalorder %s28, 0
      %p113 = por %p111, %p112
      %p114 = scmp.ne.s32.totalorder %s100, %s101
      %p115 = scmp.eq.s32.totalorder %s29, 3
      %p116 = por %p114, %p115
      %p118 = scmp.ne.s32.totalorder %s101, %s117
      %p119 = scmp.eq.s32.totalorder %s29, 0
      %p120 = por %p118, %p119
      %s121 = ssub.s32 %s31, %s38
      %p122 = scmp.eq.s32.totalorder %s121, 0
      %s124 = sadd.s32 %s123, 1
      %s125 = scalar_select %p122, %s123, %s124
      %p128 = pneg %p122
      %p129 = scmp.eq.s32.totalorder %s23, 3
      %p130 = por %p128, %p129
      %p131 = scmp.ne.s32.totalorder %s123, %s126
      %p132 = scmp.eq.s32.totalorder %s23, 0
      %p133 = por %p131, %p132
      %p134 = scmp.ne.s32.totalorder %s123, %s126
      %p135 = scmp.eq.s32.totalorder %s28, 3
      %p136 = por %p134, %p135
      %p137 = scmp.ne.s32.totalorder %s126, %s127
      %p138 = scmp.eq.s32.totalorder %s28, 0
      %p139 = por %p137, %p138
      %p140 = scmp.ne.s32.totalorder %s126, %s127
      %p141 = scmp.eq.s32.totalorder %s29, 3
      %p142 = por %p140, %p141
      %p144 = scmp.ne.s32.totalorder %s127, %s143
      %p145 = scmp.eq.s32.totalorder %s29, 0
      %p146 = por %p144, %p145
      %s147 = ssub.s32 %s31, %s38
      %p148 = scmp.eq.s32.totalorder %s147, 0
      %s150 = sadd.s32 %s149, 1
      %s151 = scalar_select %p148, %s149, %s150
      %p154 = pneg %p148
      %p155 = scmp.eq.s32.totalorder %s23, 3
      %p156 = por %p154, %p155
      %p157 = scmp.ne.s32.totalorder %s149, %s152
      %p158 = scmp.eq.s32.totalorder %s23, 0
      %p159 = por %p157, %p158
      %p160 = scmp.ne.s32.totalorder %s149, %s152
      %p161 = scmp.eq.s32.totalorder %s28, 3
      %p162 = por %p160, %p161
      %p163 = scmp.ne.s32.totalorder %s152, %s153
      %p164 = scmp.eq.s32.totalorder %s28, 0
      %p165 = por %p163, %p164
      %p166 = scmp.ne.s32.totalorder %s152, %s153
      %p167 = scmp.eq.s32.totalorder %s29, 3
      %p168 = por %p166, %p167
      %p170 = scmp.ne.s32.totalorder %s153, %s169
      %p171 = scmp.eq.s32.totalorder %s29, 0
      %p172 = por %p170, %p171
      %s173 = ssub.s32 %s31, %s38
      %p174 = scmp.eq.s32.totalorder %s173, 0
      %s176 = sadd.s32 %s175, 1
      %s177 = scalar_select %p174, %s175, %s176
      %p180 = pneg %p174
      %p181 = scmp.eq.s32.totalorder %s23, 3
      %p182 = por %p180, %p181
      %p183 = scmp.ne.s32.totalorder %s175, %s178
      %p184 = scmp.eq.s32.totalorder %s23, 0
      %p185 = por %p183, %p184
      %p186 = scmp.ne.s32.totalorder %s175, %s178
      %p187 = scmp.eq.s32.totalorder %s28, 3
      %p188 = por %p186, %p187
      %p189 = scmp.ne.s32.totalorder %s178, %s179
      %p190 = scmp.eq.s32.totalorder %s28, 0
      %p191 = por %p189, %p190
      %p192 = scmp.ne.s32.totalorder %s178, %s179
      %p193 = scmp.eq.s32.totalorder %s29, 3
      %p194 = por %p192, %p193
      %p196 = scmp.ne.s32.totalorder %s179, %s195
      %p197 = scmp.eq.s32.totalorder %s29, 0
      %p198 = por %p196, %p197
      %s199 = ssub.s32 %s31, %s38
      %p200 = scmp.eq.s32.totalorder %s199, 0
      %s202 = sadd.s32 %s201, 1
      %s203 = scalar_select %p200, %s201, %s202
      %p206 = pneg %p200
      %p207 = scmp.eq.s32.totalorder %s23, 3
      %p208 = por %p206, %p207
      %p209 = scmp.ne.s32.totalorder %s201, %s204
      %p210 = scmp.eq.s32.totalorder %s23, 0
      %p211 = por %p209, %p210
      %p212 = scmp.ne.s32.totalorder %s201, %s204
      %p213 = scmp.eq.s32.totalorder %s28, 3
      %p214 = por %p212, %p213
      %p215 = scmp.ne.s32.totalorder %s204, %s205
      %p216 = scmp.eq.s32.totalorder %s28, 0
      %p217 = por %p215, %p216
      %p218 = scmp.ne.s32.totalorder %s204, %s205
      %p219 = scmp.eq.s32.totalorder %s29, 3
      %p220 = por %p218, %p219
      %p222 = scmp.ne.s32.totalorder %s205, %s221
      %p223 = scmp.eq.s32.totalorder %s29, 0
      %p224 = por %p222, %p223
      %s225 = ssub.s32 %s31, %s38
      %p226 = scmp.eq.s32.totalorder %s225, 0
      %s228 = sadd.s32 %s227, 1
      %s229 = scalar_select %p226, %s227, %s228
      %p232 = pneg %p226
      %p233 = scmp.eq.s32.totalorder %s23, 3
      %p234 = por %p232, %p233
      %p235 = scmp.ne.s32.totalorder %s227, %s230
      %p236 = scmp.eq.s32.totalorder %s23, 0
      %p237 = por %p235, %p236
      %p238 = scmp.ne.s32.totalorder %s227, %s230
      %p239 = scmp.eq.s32.totalorder %s28, 3
      %p240 = por %p238, %p239
      %p241 = scmp.ne.s32.totalorder %s230, %s231
      %p242 = scmp.eq.s32.totalorder %s28, 0
      %p243 = por %p241, %p242
      %p244 = scmp.ne.s32.totalorder %s230, %s231
      %p245 = scmp.eq.s32.totalorder %s29, 3
      %p246 = por %p244, %p245
      %p248 = scmp.ne.s32.totalorder %s231, %s247
      %p249 = scmp.eq.s32.totalorder %s29, 0
      %p250 = por %p248, %p249
      %s251 = ssub.s32 %s31, %s38
      %p252 = scmp.eq.s32.totalorder %s251, 0
      %s254 = sadd.s32 %s253, 1
      %s255 = scalar_select %p252, %s253, %s254
      %p258 = pneg %p252
      %p259 = scmp.eq.s32.totalorder %s23, 3
      %p260 = por %p258, %p259
      %p261 = scmp.ne.s32.totalorder %s253, %s256
      %p262 = scmp.eq.s32.totalorder %s23, 0
      %p263 = por %p261, %p262
      %p264 = scmp.ne.s32.totalorder %s253, %s256
      %p265 = scmp.eq.s32.totalorder %s28, 3
      %p266 = por %p264, %p265
      %p267 = scmp.ne.s32.totalorder %s256, %s257
      %p268 = scmp.eq.s32.totalorder %s28, 0
      %p269 = por %p267, %p268
      %p270 = scmp.ne.s32.totalorder %s256, %s257
      %p271 = scmp.eq.s32.totalorder %s29, 3
      %p272 = por %p270, %p271
      %p274 = scmp.ne.s32.totalorder %s257, %s273
      %p275 = scmp.eq.s32.totalorder %s29, 0
      %p276 = por %p274, %p275
      %s277 = ssub.s32 %s31, %s38
      %p278 = scmp.eq.s32.totalorder %s277, 0
      %s280 = sadd.s32 %s279, 1
      %s281 = scalar_select %p278, %s279, %s280
      %p284 = pneg %p278
      %p285 = scmp.eq.s32.totalorder %s23, 3
      %p286 = por %p284, %p285
      %p287 = scmp.ne.s32.totalorder %s279, %s282
      %p288 = scmp.eq.s32.totalorder %s23, 0
      %p289 = por %p287, %p288
      %p290 = scmp.ne.s32.totalorder %s279, %s282
      %p291 = scmp.eq.s32.totalorder %s28, 3
      %p292 = por %p290, %p291
      %p293 = scmp.ne.s32.totalorder %s282, %s283
      %p294 = scmp.eq.s32.totalorder %s28, 0
      %p295 = por %p293, %p294
      %p296 = scmp.ne.s32.totalorder %s282, %s283
      %p297 = scmp.eq.s32.totalorder %s29, 3
      %p298 = por %p296, %p297
      %p300 = scmp.ne.s32.totalorder %s283, %s299
      %p301 = scmp.eq.s32.totalorder %s29, 0
      %p302 = por %p300, %p301
      %s303 = ssub.s32 %s31, %s38
      %p304 = scmp.eq.s32.totalorder %s303, 0
      %s306 = sadd.s32 %s305, 1
      %s307 = scalar_select %p304, %s305, %s306
      %p310 = pneg %p304
      %p311 = scmp.eq.s32.totalorder %s23, 3
      %p312 = por %p310, %p311
      %p313 = scmp.ne.s32.totalorder %s305, %s308
      %p314 = scmp.eq.s32.totalorder %s23, 0
      %p315 = por %p313, %p314
      %p316 = scmp.ne.s32.totalorder %s305, %s308
      %p317 = scmp.eq.s32.totalorder %s28, 3
      %p318 = por %p316, %p317
      %p319 = scmp.ne.s32.totalorder %s308, %s309
      %p320 = scmp.eq.s32.totalorder %s28, 0
      %p321 = por %p319, %p320
      %p322 = scmp.ne.s32.totalorder %s308, %s309
      %p323 = scmp.eq.s32.totalorder %s29, 3
      %p324 = por %p322, %p323
      %p326 = scmp.ne.s32.totalorder %s309, %s325
      %p327 = scmp.eq.s32.totalorder %s29, 0
      %p328 = por %p326, %p327
      %s329 = ssub.s32 %s31, %s38
      %p330 = scmp.eq.s32.totalorder %s329, 0
      %s332 = sadd.s32 %s331, 1
      %s333 = scalar_select %p330, %s331, %s332
      %p336 = pneg %p330
      %p337 = scmp.eq.s32.totalorder %s23, 3
      %p338 = por %p336, %p337
      %p339 = scmp.ne.s32.totalorder %s331, %s334
      %p340 = scmp.eq.s32.totalorder %s23, 0
      %p341 = por %p339, %p340
      %p342 = scmp.ne.s32.totalorder %s331, %s334
      %p343 = scmp.eq.s32.totalorder %s28, 3
      %p344 = por %p342, %p343
      %p345 = scmp.ne.s32.totalorder %s334, %s335
      %p346 = scmp.eq.s32.totalorder %s28, 0
      %p347 = por %p345, %p346
      %p348 = scmp.ne.s32.totalorder %s334, %s335
      %p349 = scmp.eq.s32.totalorder %s29, 3
      %p350 = por %p348, %p349
      %p352 = scmp.ne.s32.totalorder %s335, %s351
      %p353 = scmp.eq.s32.totalorder %s29, 0
      %p354 = por %p352, %p353
      %s356 = sadd.s32 %s355, 1
      %p359 = scmp.eq.s32.totalorder %s23, 3
      %p360 = scmp.ne.s32.totalorder %s355, %s357
      %p361 = scmp.eq.s32.totalorder %s23, 0
      %p362 = por %p360, %p361
      %p363 = scmp.ne.s32.totalorder %s355, %s357
      %p364 = scmp.eq.s32.totalorder %s28, 3
      %p365 = por %p363, %p364
      %p366 = scmp.ne.s32.totalorder %s357, %s358
      %p367 = scmp.eq.s32.totalorder %s28, 0
      %p368 = por %p366, %p367
      %p369 = scmp.ne.s32.totalorder %s357, %s358
      %p370 = scmp.eq.s32.totalorder %s29, 3
      %p371 = por %p369, %p370
      %p373 = scmp.ne.s32.totalorder %s358, %s372
      %p374 = scmp.eq.s32.totalorder %s29, 0
      %p375 = por %p373, %p374
      %s377 = sadd.s32 %s376, 1
      %p380 = scmp.eq.s32.totalorder %s23, 3
      %p381 = scmp.ne.s32.totalorder %s376, %s378
      %p382 = scmp.eq.s32.totalorder %s23, 0
      %p383 = por %p381, %p382
      %p384 = scmp.ne.s32.totalorder %s376, %s378
      %p385 = scmp.eq.s32.totalorder %s28, 3
      %p386 = por %p384, %p385
      %p387 = scmp.ne.s32.totalorder %s378, %s379
      %p388 = scmp.eq.s32.totalorder %s28, 0
      %p389 = por %p387, %p388
      %p390 = scmp.ne.s32.totalorder %s378, %s379
      %p391 = scmp.eq.s32.totalorder %s29, 3
      %p392 = por %p390, %p391
      %p394 = scmp.ne.s32.totalorder %s379, %s393
      %p395 = scmp.eq.s32.totalorder %s29, 0
      %p396 = por %p394, %p395
      %s397 = ssub.s32 %s30, %s42
      %p398 = scmp.eq.s32.totalorder %s397, 0
      %s400 = sadd.s32 %s399, 1
      %s401 = scalar_select %p398, %s399, %s400
      %p404 = pneg %p398
      %p405 = scmp.eq.s32.totalorder %s23, 3
      %p406 = por %p404, %p405
      %p407 = scmp.ne.s32.totalorder %s399, %s402
      %p408 = scmp.eq.s32.totalorder %s23, 0
      %p409 = por %p407, %p408
      %p410 = scmp.ne.s32.totalorder %s399, %s402
      %p411 = scmp.eq.s32.totalorder %s28, 3
      %p412 = por %p410, %p411
      %p413 = scmp.ne.s32.totalorder %s402, %s403
      %p414 = scmp.eq.s32.totalorder %s28, 0
      %p415 = por %p413, %p414
      %p416 = scmp.ne.s32.totalorder %s402, %s403
      %p417 = scmp.eq.s32.totalorder %s29, 3
      %p418 = por %p416, %p417
      %p420 = scmp.ne.s32.totalorder %s403, %s419
      %p421 = scmp.eq.s32.totalorder %s29, 0
      %p422 = por %p420, %p421
      %p423 = scmp.le.s32.totalorder 1, %s23
      %p424 = scmp.lt.s32.totalorder %s23, 5
      %p425 = pnand %p423, %p424
      %p426 = pneg %p425
      // Predicated region
      $region9: #{tpu_custom_call.1} parent=5 // pred_check
        _
      $region10: #{tpu_custom_call.1} parent=5 // pred_check_branch
        %428 = sbr.rel (%p425) target = $region12
      $region11: #{tpu_custom_call.1} parent=5 // pred_region
        %s429 = ssub.s32 %s23, 1
        // Predicated region
        $region13: #{tpu_custom_call.1} parent=11 // pred_check
          %p430 = pneg %p368
        $region14: #{tpu_custom_call.1} parent=11 // pred_check_branch
          %432 = sbr.rel (%p430) target = $region16
        $region15: #{tpu_custom_call.1} parent=11 // pred_region
          _
        $region16: #{tpu_custom_call.1} parent=11 // pred_fallthru
          _
        // Predicated region
        $region17: #{tpu_custom_call.1} parent=11 // pred_check
          %p433 = pneg %p389
        $region18: #{tpu_custom_call.1} parent=11 // pred_check_branch
          %435 = sbr.rel (%p433) target = $region20
        $region19: #{tpu_custom_call.1} parent=11 // pred_region
          _
        $region20: #{tpu_custom_call.1} parent=11 // pred_fallthru
          _
      $region12: #{tpu_custom_call.1} parent=5 // pred_fallthru
        _
      %p436 = scmp.lt.s32.totalorder %s23, 4
      // Predicated region
      $region21: #{tpu_custom_call.1} parent=5 // pred_check
        %p437 = pneg %p436
      $region22: #{tpu_custom_call.1} parent=5 // pred_check_branch
        %439 = sbr.rel (%p437) target = $region24
      $region23: #{tpu_custom_call.1} parent=5 // pred_region
        // Predicated region
        $region25: #{tpu_custom_call.1} parent=23 // pred_check
          %p440 = pneg %p55
        $region26: #{tpu_custom_call.1} parent=23 // pred_check_branch
          %442 = sbr.rel (%p440) target = $region28
        $region27: #{tpu_custom_call.1} parent=23 // pred_region
          %p443 = scmp.lt.s32.totalorder %s30, 1
          %s444 = scalar_select %p443, %s30, 1
          %s445 = smul.addr %s444, 8
          %s446 = scalar_lea.vmem %s0, %s445
        $region28: #{tpu_custom_call.1} parent=23 // pred_fallthru
          _
        // Predicated region
        $region29: #{tpu_custom_call.1} parent=23 // pred_check
          %p447 = pneg %p81
        $region30: #{tpu_custom_call.1} parent=23 // pred_check_branch
          %449 = sbr.rel (%p447) target = $region32
        $region31: #{tpu_custom_call.1} parent=23 // pred_region
          %p450 = scmp.lt.s32.totalorder %s31, 1
          %s451 = scalar_select %p450, %s31, 1
          %s452 = scalar_lea.vmem %s1, %s451
        $region32: #{tpu_custom_call.1} parent=23 // pred_fallthru
          _
        // Predicated region
        $region33: #{tpu_custom_call.1} parent=23 // pred_check
          %p453 = pneg %p107
        $region34: #{tpu_custom_call.1} parent=23 // pred_check_branch
          %455 = sbr.rel (%p453) target = $region36
        $region35: #{tpu_custom_call.1} parent=23 // pred_region
          %p456 = scmp.lt.s32.totalorder %s31, 1
          %s457 = scalar_select %p456, %s31, 1
          %s458 = scalar_lea.vmem %s2, %s457
        $region36: #{tpu_custom_call.1} parent=23 // pred_fallthru
          _
        // Predicated region
        $region37: #{tpu_custom_call.1} parent=23 // pred_check
          %p459 = pneg %p133
        $region38: #{tpu_custom_call.1} parent=23 // pred_check_branch
          %461 = sbr.rel (%p459) target = $region40
        $region39: #{tpu_custom_call.1} parent=23 // pred_region
          %p462 = scmp.lt.s32.totalorder %s31, 1
          %s463 = scalar_select %p462, %s31, 1
          %s464 = smul.addr %s463, 48
          %s465 = smul.addr %s464, 4
          %s466 = scalar_lea.vmem %s3, %s465
        $region40: #{tpu_custom_call.1} parent=23 // pred_fallthru
          _
        // Predicated region
        $region41: #{tpu_custom_call.1} parent=23 // pred_check
          %p467 = pneg %p159
        $region42: #{tpu_custom_call.1} parent=23 // pred_check_branch
          %469 = sbr.rel (%p467) target = $region44
        $region43: #{tpu_custom_call.1} parent=23 // pred_region
          %p470 = scmp.lt.s32.totalorder %s31, 1
          %s471 = scalar_select %p470, %s31, 1
          %s472 = smul.addr %s471, 4
          %s473 = smul.addr %s472, 4
          %s474 = scalar_lea.vmem %s4, %s473
        $region44: #{tpu_custom_call.1} parent=23 // pred_fallthru
          _
        // Predicated region
        $region45: #{tpu_custom_call.1} parent=23 // pred_check
          %p475 = pneg %p185
        $region46: #{tpu_custom_call.1} parent=23 // pred_check_branch
          %477 = sbr.rel (%p475) target = $region48
        $region47: #{tpu_custom_call.1} parent=23 // pred_region
          %p478 = scmp.lt.s32.totalorder %s31, 1
          %s479 = scalar_select %p478, %s31, 1
          %s480 = scalar_lea.vmem %s5, %s479
        $region48: #{tpu_custom_call.1} parent=23 // pred_fallthru
          _
        // Predicated region
        $region49: #{tpu_custom_call.1} parent=23 // pred_check
          %p481 = pneg %p211
        $region50: #{tpu_custom_call.1} parent=23 // pred_check_branch
          %483 = sbr.rel (%p481) target = $region52
        $region51: #{tpu_custom_call.1} parent=23 // pred_region
          %p484 = scmp.lt.s32.totalorder %s31, 1
          %s485 = scalar_select %p484, %s31, 1
          %s486 = scalar_lea.vmem %s6, %s485
        $region52: #{tpu_custom_call.1} parent=23 // pred_fallthru
          _
        // Predicated region
        $region53: #{tpu_custom_call.1} parent=23 // pred_check
          %p487 = pneg %p237
        $region54: #{tpu_custom_call.1} parent=23 // pred_check_branch
          %489 = sbr.rel (%p487) target = $region56
        $region55: #{tpu_custom_call.1} parent=23 // pred_region
          %p490 = scmp.lt.s32.totalorder %s31, 1
          %s491 = scalar_select %p490, %s31, 1
          %s492 = scalar_lea.vmem %s7, %s491
        $region56: #{tpu_custom_call.1} parent=23 // pred_fallthru
          _
        // Predicated region
        $region57: #{tpu_custom_call.1} parent=23 // pred_check
          %p493 = pneg %p263
        $region58: #{tpu_custom_call.1} parent=23 // pred_check_branch
          %495 = sbr.rel (%p493) target = $region60
        $region59: #{tpu_custom_call.1} parent=23 // pred_region
          %p496 = scmp.lt.s32.totalorder %s31, 1
          %s497 = scalar_select %p496, %s31, 1
          %s498 = smul.addr %s497, 4
          %s499 = smul.addr %s498, 4
          %s500 = scalar_lea.vmem %s8, %s499
        $region60: #{tpu_custom_call.1} parent=23 // pred_fallthru
          _
        // Predicated region
        $region61: #{tpu_custom_call.1} parent=23 // pred_check
          %p501 = pneg %p289
        $region62: #{tpu_custom_call.1} parent=23 // pred_check_branch
          %503 = sbr.rel (%p501) target = $region64
        $region63: #{tpu_custom_call.1} parent=23 // pred_region
          %p504 = scmp.lt.s32.totalorder %s31, 1
          %s505 = scalar_select %p504, %s31, 1
          %s506 = scalar_lea.vmem %s9, %s505
        $region64: #{tpu_custom_call.1} parent=23 // pred_fallthru
          _
        // Predicated region
        $region65: #{tpu_custom_call.1} parent=23 // pred_check
          %p507 = pneg %p315
        $region66: #{tpu_custom_call.1} parent=23 // pred_check_branch
          %509 = sbr.rel (%p507) target = $region68
        $region67: #{tpu_custom_call.1} parent=23 // pred_region
          %p510 = scmp.lt.s32.totalorder %s31, 1
          %s511 = scalar_select %p510, %s31, 1
          %s512 = smul.addr %s511, 8
          %s513 = smul.addr %s512, 4
          %s514 = scalar_lea.vmem %s10, %s513
        $region68: #{tpu_custom_call.1} parent=23 // pred_fallthru
          _
        // Predicated region
        $region69: #{tpu_custom_call.1} parent=23 // pred_check
          %p515 = pneg %p341
        $region70: #{tpu_custom_call.1} parent=23 // pred_check_branch
          %517 = sbr.rel (%p515) target = $region72
        $region71: #{tpu_custom_call.1} parent=23 // pred_region
          %p518 = scmp.lt.s32.totalorder %s31, 1
          %s519 = scalar_select %p518, %s31, 1
          %s520 = scalar_lea.vmem %s11, %s519
        $region72: #{tpu_custom_call.1} parent=23 // pred_fallthru
          _
      $region24: #{tpu_custom_call.1} parent=5 // pred_fallthru
        _
      %p521 = scmp.le.s32.totalorder 1, %s23
      %p522 = scmp.lt.s32.totalorder %s23, 5
      %p523 = pnand %p521, %p522
      %p524 = pneg %p523
      // Predicated region
      $region73: #{tpu_custom_call.1} parent=5 // pred_check
        _
      $region74: #{tpu_custom_call.1} parent=5 // pred_check_branch
        %526 = sbr.rel (%p523) target = $region76
      $region75: #{tpu_custom_call.1} parent=5 // pred_region
        %s527 = ssub.s32 %s23, 1
        %p528 = scmp.lt.s32.totalorder %s32, 1
        %s529 = scalar_select %p528, %s32, 1
        %s530 = smul.addr %s529, 8
        %s531 = scalar_lea.vmem %s0, %s530
        %p532 = pneg %p61
        %p533 = pneg %p58
        %p534 = scmp.lt.s32.totalorder %s33, 1
        %s535 = scalar_select %p534, %s33, 1
        %s536 = scalar_lea.vmem %s1, %s535
        %p537 = pneg %p87
        %p538 = pneg %p84
        %p539 = scmp.lt.s32.totalorder %s33, 1
        %s540 = scalar_select %p539, %s33, 1
        %s541 = scalar_lea.vmem %s2, %s540
        %p542 = pneg %p113
        %p543 = pneg %p110
        %p544 = scmp.lt.s32.totalorder %s33, 1
        %s545 = scalar_select %p544, %s33, 1
        %s546 = smul.addr %s545, 48
        %s547 = smul.addr %s546, 4
        %s548 = scalar_lea.vmem %s3, %s547
        %p549 = pneg %p139
        %p550 = pneg %p136
        %p551 = scmp.lt.s32.totalorder %s33, 1
        %s552 = scalar_select %p551, %s33, 1
        %s553 = smul.addr %s552, 4
        %s554 = smul.addr %s553, 4
        %s555 = scalar_lea.vmem %s4, %s554
        %p556 = pneg %p165
        %p557 = pneg %p162
        %p558 = scmp.lt.s32.totalorder %s33, 1
        %s559 = scalar_select %p558, %s33, 1
        %s560 = scalar_lea.vmem %s5, %s559
        %p561 = pneg %p191
        %p562 = pneg %p188
        %p563 = scmp.lt.s32.totalorder %s33, 1
        %s564 = scalar_select %p563, %s33, 1
        %s565 = scalar_lea.vmem %s6, %s564
        %p566 = pneg %p217
        %p567 = pneg %p214
        %p568 = scmp.lt.s32.totalorder %s33, 1
        %s569 = scalar_select %p568, %s33, 1
        %s570 = scalar_lea.vmem %s7, %s569
        %p571 = pneg %p243
        %p572 = pneg %p240
        %p573 = scmp.lt.s32.totalorder %s33, 1
        %s574 = scalar_select %p573, %s33, 1
        %s575 = smul.addr %s574, 4
        %s576 = smul.addr %s575, 4
        %s577 = scalar_lea.vmem %s8, %s576
        %p578 = pneg %p269
        %p579 = pneg %p266
        %p580 = scmp.lt.s32.totalorder %s33, 1
        %s581 = scalar_select %p580, %s33, 1
        %s582 = scalar_lea.vmem %s9, %s581
        %p583 = pneg %p295
        %p584 = pneg %p292
        %p585 = scmp.lt.s32.totalorder %s33, 1
        %s586 = scalar_select %p585, %s33, 1
        %s587 = smul.addr %s586, 8
        %s588 = smul.addr %s587, 4
        %s589 = scalar_lea.vmem %s10, %s588
        %p590 = pneg %p321
        %p591 = pneg %p318
        %p592 = scmp.lt.s32.totalorder %s33, 1
        %s593 = scalar_select %p592, %s33, 1
        %s594 = scalar_lea.vmem %s11, %s593
        %p595 = pneg %p347
        %p596 = pneg %p344
        %p597 = pneg %p368
        %p598 = pneg %p365
        %p599 = pneg %p389
        %p600 = pneg %p386
        %p601 = pneg %p415
        %p602 = pneg %p412
        %s603 = sand.u32 %s402, 1
        %s604 = scalar_lea.sflag [#allocation4], %s603
        %s605 = sand.u32 %s402, 1
        %s606 = smul.addr %s605, 8
        %s607 = scalar_lea.vmem [#allocation3], %s606
        %p608 = scmp.lt.s32.totalorder %s32, 1
        %s609 = scalar_select %p608, %s32, 1
        %s610 = smul.addr %s609, 8
        %s611 = scalar_lea.vmem %s0, %s610
        %p612 = scmp.lt.s32.totalorder %s33, 1
        %s613 = scalar_select %p612, %s33, 1
        %s614 = scalar_lea.vmem %s1, %s613
        %p615 = scmp.lt.s32.totalorder %s33, 1
        %s616 = scalar_select %p615, %s33, 1
        %s617 = scalar_lea.vmem %s2, %s616
        %p618 = scmp.lt.s32.totalorder %s33, 1
        %s619 = scalar_select %p618, %s33, 1
        %s620 = smul.addr %s619, 48
        %s621 = smul.addr %s620, 4
        %s622 = scalar_lea.vmem %s3, %s621
        %p623 = scmp.lt.s32.totalorder %s33, 1
        %s624 = scalar_select %p623, %s33, 1
        %s625 = smul.addr %s624, 4
        %s626 = smul.addr %s625, 4
        %s627 = scalar_lea.vmem %s4, %s626
        %p628 = scmp.lt.s32.totalorder %s33, 1
        %s629 = scalar_select %p628, %s33, 1
        %s630 = scalar_lea.vmem %s5, %s629
        %p631 = scmp.lt.s32.totalorder %s33, 1
        %s632 = scalar_select %p631, %s33, 1
        %s633 = scalar_lea.vmem %s6, %s632
        %p634 = scmp.lt.s32.totalorder %s33, 1
        %s635 = scalar_select %p634, %s33, 1
        %s636 = scalar_lea.vmem %s7, %s635
        %p637 = scmp.lt.s32.totalorder %s33, 1
        %s638 = scalar_select %p637, %s33, 1
        %s639 = smul.addr %s638, 4
        %s640 = smul.addr %s639, 4
        %s641 = scalar_lea.vmem %s8, %s640
        %p642 = scmp.lt.s32.totalorder %s33, 1
        %s643 = scalar_select %p642, %s33, 1
        %s644 = scalar_lea.vmem %s9, %s643
        %p645 = scmp.lt.s32.totalorder %s33, 1
        %s646 = scalar_select %p645, %s33, 1
        %s647 = smul.addr %s646, 8
        %s648 = smul.addr %s647, 4
        %s649 = scalar_lea.vmem %s10, %s648
        %p650 = scmp.lt.s32.totalorder %s33, 1
        %s651 = scalar_select %p650, %s33, 1
        %s652 = scalar_lea.vmem %s11, %s651
        %p654 = scmp.eq.s32.totalorder %s33, 0
        // Predicated region
        $region77: #{tpu_custom_call.1} parent=75 // pred_check
          %p655 = pneg %p654
        $region78: #{tpu_custom_call.1} parent=75 // pred_check_branch
          %657 = sbr.rel (%p655) target = $region80
        $region79: #{tpu_custom_call.1} parent=75 // pred_region
          %v658 = vld [vmem:[%s611] sm:$0xff]
          %vm659 = vcmask 261120
          %660 = vst.msk [vmem:[#allocation2] sm:$0xff] %vm659, %v658
        $region80: #{tpu_custom_call.1} parent=75 // pred_fallthru
          _
        %v661 = vld [vmem:[#allocation2] sm:$0xff]
        %v662 = vld [vmem:[%s614] sm:$0x1]
        %v663 = vld [vmem:[%s617] sm:$0x1]
        %vm664 = vcmask 261120
        %v665 = vsel %vm664, %v661, 0.0
        %666 = vadd.xlane.f32.xlu0 %v665
        %v667 = vpop.xlane.xlu0 %666
        %v668 = vrcp.pop 32.0
        %v669 = vmul.f32 %v667, %v668
        %v670 = vsub.f32 %v661, %v669
        %v671 = vmul.f32 %v670, %v670
        %v672 = vsel %vm664, %v671, 0.0
        %673 = vadd.xlane.f32.xlu0 %v672
        %v674 = vpop.xlane.xlu0 %673
        %v675 = vmul.f32 %v674, %v668
        %v676 = vadd.f32 %v675, 1e-05
        %v677 = vrsqrt.pop %v676
        %v678 = vmul.f32 %v670, %v677
        %v680 = vlaneseq
        %v681 = vshrl.u32 %v680, 7
        %v682 = vsub.s32 0, %v681
        %v683 = vrot.slane %v662, %v682
        %v685 = vmul.f32 %v678, %v683
        %v687 = vlaneseq
        %v688 = vshrl.u32 %v687, 7
        %v689 = vsub.s32 0, %v688
        %v690 = vrot.slane %v663, %v689
        %v692 = vadd.f32 %v685, %v690
        %v693 = vpack.c.bf16 %v692, %v692
        %v694 = vld [vmem:[%s622] sm:$0xf]
        %v695 = vld [vmem:[%s622 + $0x4] sm:$0xf]
        %v696 = vld [vmem:[%s622 + $0x8] sm:$0xf]
        %v697 = vld [vmem:[%s622 + $0xc] sm:$0xf]
        %v698 = vld [vmem:[%s622 + $0x10] sm:$0xf]
        %v699 = vld [vmem:[%s622 + $0x14] sm:$0xf]
        %v700 = vld [vmem:[%s622 + $0x18] sm:$0xf]
        %v701 = vld [vmem:[%s622 + $0x1c] sm:$0xf]
        %v702 = vld [vmem:[%s622 + $0x20] sm:$0xf]
        %v703 = vld [vmem:[%s622 + $0x24] sm:$0xf]
        %v704 = vld [vmem:[%s622 + $0x28] sm:$0xf]
        %v705 = vld [vmem:[%s622 + $0x2c] sm:$0xf]
        %v706 = vld [vmem:[%s622 + $0x30] sm:$0xf]
        %v707 = vld [vmem:[%s622 + $0x34] sm:$0xf]
        %v708 = vld [vmem:[%s622 + $0x38] sm:$0xf]
        %v709 = vld [vmem:[%s622 + $0x3c] sm:$0xf]
        %v710 = vld [vmem:[%s622 + $0x40] sm:$0xf]
        %v711 = vld [vmem:[%s622 + $0x44] sm:$0xf]
        %v712 = vld [vmem:[%s622 + $0x48] sm:$0xf]
        %v713 = vld [vmem:[%s622 + $0x4c] sm:$0xf]
        %v714 = vld [vmem:[%s622 + $0x50] sm:$0xf]
        %v715 = vld [vmem:[%s622 + $0x54] sm:$0xf]
        %v716 = vld [vmem:[%s622 + $0x58] sm:$0xf]
        %v717 = vld [vmem:[%s622 + $0x5c] sm:$0xf]
        %v718 = vld [vmem:[%s622 + $0x60] sm:$0xf]
        %v719 = vld [vmem:[%s622 + $0x64] sm:$0xf]
        %v720 = vld [vmem:[%s622 + $0x68] sm:$0xf]
        %v721 = vld [vmem:[%s622 + $0x6c] sm:$0xf]
        %v722 = vld [vmem:[%s622 + $0x70] sm:$0xf]
        %v723 = vld [vmem:[%s622 + $0x74] sm:$0xf]
        %v724 = vld [vmem:[%s622 + $0x78] sm:$0xf]
        %v725 = vld [vmem:[%s622 + $0x7c] sm:$0xf]
        %v726 = vld [vmem:[%s622 + $0x80] sm:$0xf]
        %v727 = vld [vmem:[%s622 + $0x84] sm:$0xf]
        %v728 = vld [vmem:[%s622 + $0x88] sm:$0xf]
        %v729 = vld [vmem:[%s622 + $0x8c] sm:$0xf]
        %v730 = vld [vmem:[%s622 + $0x90] sm:$0xf]
        %v731 = vld [vmem:[%s622 + $0x94] sm:$0xf]
        %v732 = vld [vmem:[%s622 + $0x98] sm:$0xf]
        %v733 = vld [vmem:[%s622 + $0x9c] sm:$0xf]
        %v734 = vld [vmem:[%s622 + $0xa0] sm:$0xf]
        %v735 = vld [vmem:[%s622 + $0xa4] sm:$0xf]
        %v736 = vld [vmem:[%s622 + $0xa8] sm:$0xf]
        %v737 = vld [vmem:[%s622 + $0xac] sm:$0xf]
        %v738 = vld [vmem:[%s622 + $0xb0] sm:$0xf]
        %v739 = vld [vmem:[%s622 + $0xb4] sm:$0xf]
        %v740 = vld [vmem:[%s622 + $0xb8] sm:$0xf]
        %v741 = vld [vmem:[%s622 + $0xbc] sm:$0xf]
        %v746 = vunpack.c.l.b16 %v694
        %v747 = vunpack.c.l.b16 %v695
        %v748 = vunpack.c.l.b16 %v696
        %v749 = vunpack.c.l.b16 %v697
        %v750 = vpack.c.b16 %v747, %v746
        %v751 = vpack.c.b16 %v749, %v748
        %v755 = vsel %vm664, %v693, 0
        %757 = vmatprep.subr.bf16.mxu0 0
        %758 = vmatpush1.bf16.msra.mxu0 %v750
        %759 = vmatprep.subr.bf16.mxu0 0
        %760 = vmatpush1.bf16.msra.mxu0 %v751
        %761 = vmatprep.subr.bf16.mxu0 0
        %762 = vmatpush1.bf16.msra.mxu0 0
        %763 = vmatprep.subr.bf16.mxu0 0
        %764 = vmatpush1.bf16.msra.mxu0 0
        %765 = vmatprep.subr.bf16.mxu0 0
        %766 = vmatpush1.bf16.msra.mxu0 0
        %767 = vmatprep.subr.bf16.mxu0 0
        %768 = vmatpush1.bf16.msra.mxu0 0
        %769 = vmatprep.subr.bf16.mxu0 0
        %770 = vmatpush1.bf16.msra.mxu0 0
        %771 = vmatprep.subr.bf16.mxu0 0
        %772 = vmatpush1.bf16.msra.mxu0 0
        %773 = vmatprep.subr.bf16.mxu0 0
        %774 = vmatpush1.bf16.msra.mxu0 0
        %775 = vmatprep.subr.bf16.mxu0 0
        %776 = vmatpush1.bf16.msra.mxu0 0
        %777 = vmatprep.subr.bf16.mxu0 0
        %778 = vmatpush1.bf16.msra.mxu0 0
        %779 = vmatprep.subr.bf16.mxu0 0
        %780 = vmatpush1.bf16.msra.mxu0 0
        %781 = vmatprep.subr.bf16.mxu0 0
        %782 = vmatpush1.bf16.msra.mxu0 0
        %783 = vmatprep.subr.bf16.mxu0 0
        %784 = vmatpush1.bf16.msra.mxu0 0
        %785 = vmatprep.subr.bf16.mxu0 0
        %786 = vmatpush1.bf16.msra.mxu0 0
        %787 = vmatprep.subr.bf16.mxu0 0
        %788 = vmatpush1.bf16.msra.mxu0 0
        %789 = vmatprep.mubr.bf16.mxu0 0
        %790 = vmatmul.mubr.bf16.gmra.mrb[0].mxu0 %v755
        %v791 = vpop.f32.mrb[0].mxu0
        %v792 = vadd.f32 0.0, %v791
        %v793 = vpop.f32.mrb[0].mxu0
        %v794 = vpop.f32.mrb[0].mxu0
        %v795 = vpop.f32.mrb[0].mxu0
        %796 = vdwg.mxu0
        %v801 = vunpack.c.l.b16 %v698
        %v802 = vunpack.c.l.b16 %v699
        %v803 = vunpack.c.l.b16 %v700
        %v804 = vunpack.c.l.b16 %v701
        %v805 = vpack.c.b16 %v802, %v801
        %v806 = vpack.c.b16 %v804, %v803
        %809 = vmatprep.subr.bf16.mxu0 0
        %810 = vmatpush1.bf16.msra.mxu0 %v805
        %811 = vmatprep.subr.bf16.mxu0 0
        %812 = vmatpush1.bf16.msra.mxu0 %v806
        %813 = vmatprep.subr.bf16.mxu0 0
        %814 = vmatpush1.bf16.msra.mxu0 0
        %815 = vmatprep.subr.bf16.mxu0 0
        %816 = vmatpush1.bf16.msra.mxu0 0
        %817 = vmatprep.subr.bf16.mxu0 0
        %818 = vmatpush1.bf16.msra.mxu0 0
        %819 = vmatprep.subr.bf16.mxu0 0
        %820 = vmatpush1.bf16.msra.mxu0 0
        %821 = vmatprep.subr.bf16.mxu0 0
        %822 = vmatpush1.bf16.msra.mxu0 0
        %823 = vmatprep.subr.bf16.mxu0 0
        %824 = vmatpush1.bf16.msra.mxu0 0
        %825 = vmatprep.subr.bf16.mxu0 0
        %826 = vmatpush1.bf16.msra.mxu0 0
        %827 = vmatprep.subr.bf16.mxu0 0
        %828 = vmatpush1.bf16.msra.mxu0 0
        %829 = vmatprep.subr.bf16.mxu0 0
        %830 = vmatpush1.bf16.msra.mxu0 0
        %831 = vmatprep.subr.bf16.mxu0 0
        %832 = vmatpush1.bf16.msra.mxu0 0
        %833 = vmatprep.subr.bf16.mxu0 0
        %834 = vmatpush1.bf16.msra.mxu0 0
        %835 = vmatprep.subr.bf16.mxu0 0
        %836 = vmatpush1.bf16.msra.mxu0 0
        %837 = vmatprep.subr.bf16.mxu0 0
        %838 = vmatpush1.bf16.msra.mxu0 0
        %839 = vmatprep.subr.bf16.mxu0 0
        %840 = vmatpush1.bf16.msra.mxu0 0
        %841 = vmatprep.mubr.bf16.mxu0 0
        %842 = vmatmul.mubr.bf16.gmra.mrb[0].mxu0 %v755
        %v843 = vpop.f32.mrb[0].mxu0
        %v844 = vadd.f32 0.0, %v843
        %v845 = vpop.f32.mrb[0].mxu0
        %v846 = vpop.f32.mrb[0].mxu0
        %v847 = vpop.f32.mrb[0].mxu0
        %848 = vdwg.mxu0
        %v853 = vunpack.c.l.b16 %v702
        %v854 = vunpack.c.l.b16 %v703
        %v855 = vunpack.c.l.b16 %v704
        %v856 = vunpack.c.l.b16 %v705
        %v857 = vpack.c.b16 %v854, %v853
        %v858 = vpack.c.b16 %v856, %v855
        %861 = vmatprep.subr.bf16.mxu0 0
        %862 = vmatpush1.bf16.msra.mxu0 %v857
        %863 = vmatprep.subr.bf16.mxu0 0
        %864 = vmatpush1.bf16.msra.mxu0 %v858
        %865 = vmatprep.subr.bf16.mxu0 0
        %866 = vmatpush1.bf16.msra.mxu0 0
        %867 = vmatprep.subr.bf16.mxu0 0
        %868 = vmatpush1.bf16.msra.mxu0 0
        %869 = vmatprep.subr.bf16.mxu0 0
        %870 = vmatpush1.bf16.msra.mxu0 0
        %871 = vmatprep.subr.bf16.mxu0 0
        %872 = vmatpush1.bf16.msra.mxu0 0
        %873 = vmatprep.subr.bf16.mxu0 0
        %874 = vmatpush1.bf16.msra.mxu0 0
        %875 = vmatprep.subr.bf16.mxu0 0
        %876 = vmatpush1.bf16.msra.mxu0 0
        %877 = vmatprep.subr.bf16.mxu0 0
        %878 = vmatpush1.bf16.msra.mxu0 0
        %879 = vmatprep.subr.bf16.mxu0 0
        %880 = vmatpush1.bf16.msra.mxu0 0
        %881 = vmatprep.subr.bf16.mxu0 0
        %882 = vmatpush1.bf16.msra.mxu0 0
        %883 = vmatprep.subr.bf16.mxu0 0
        %884 = vmatpush1.bf16.msra.mxu0 0
        %885 = vmatprep.subr.bf16.mxu0 0
        %886 = vmatpush1.bf16.msra.mxu0 0
        %887 = vmatprep.subr.bf16.mxu0 0
        %888 = vmatpush1.bf16.msra.mxu0 0
        %889 = vmatprep.subr.bf16.mxu0 0
        %890 = vmatpush1.bf16.msra.mxu0 0
        %891 = vmatprep.subr.bf16.mxu0 0
        %892 = vmatpush1.bf16.msra.mxu0 0
        %893 = vmatprep.mubr.bf16.mxu0 0
        %894 = vmatmul.mubr.bf16.gmra.mrb[0].mxu0 %v755
        %v895 = vpop.f32.mrb[0].mxu0
        %v896 = vadd.f32 0.0, %v895
        %v897 = vpop.f32.mrb[0].mxu0
        %v898 = vpop.f32.mrb[0].mxu0
        %v899 = vpop.f32.mrb[0].mxu0
        %900 = vdwg.mxu0
        %v905 = vunpack.c.l.b16 %v706
        %v906 = vunpack.c.l.b16 %v707
        %v907 = vunpack.c.l.b16 %v708
        %v908 = vunpack.c.l.b16 %v709
        %v909 = vpack.c.b16 %v906, %v905
        %v910 = vpack.c.b16 %v908, %v907
        %913 = vmatprep.subr.bf16.mxu0 0
        %914 = vmatpush1.bf16.msra.mxu0 %v909
        %915 = vmatprep.subr.bf16.mxu0 0
        %916 = vmatpush1.bf16.msra.mxu0 %v910
        %917 = vmatprep.subr.bf16.mxu0 0
        %918 = vmatpush1.bf16.msra.mxu0 0
        %919 = vmatprep.subr.bf16.mxu0 0
        %920 = vmatpush1.bf16.msra.mxu0 0
        %921 = vmatprep.subr.bf16.mxu0 0
        %922 = vmatpush1.bf16.msra.mxu0 0
        %923 = vmatprep.subr.bf16.mxu0 0
        %924 = vmatpush1.bf16.msra.mxu0 0
        %925 = vmatprep.subr.bf16.mxu0 0
        %926 = vmatpush1.bf16.msra.mxu0 0
        %927 = vmatprep.subr.bf16.mxu0 0
        %928 = vmatpush1.bf16.msra.mxu0 0
        %929 = vmatprep.subr.bf16.mxu0 0
        %930 = vmatpush1.bf16.msra.mxu0 0
        %931 = vmatprep.subr.bf16.mxu0 0
        %932 = vmatpush1.bf16.msra.mxu0 0
        %933 = vmatprep.subr.bf16.mxu0 0
        %934 = vmatpush1.bf16.msra.mxu0 0
        %935 = vmatprep.subr.bf16.mxu0 0
        %936 = vmatpush1.bf16.msra.mxu0 0
        %937 = vmatprep.subr.bf16.mxu0 0
        %938 = vmatpush1.bf16.msra.mxu0 0
        %939 = vmatprep.subr.bf16.mxu0 0
        %940 = vmatpush1.bf16.msra.mxu0 0
        %941 = vmatprep.subr.bf16.mxu0 0
        %942 = vmatpush1.bf16.msra.mxu0 0
        %943 = vmatprep.subr.bf16.mxu0 0
        %944 = vmatpush1.bf16.msra.mxu0 0
        %945 = vmatprep.mubr.bf16.mxu0 0
        %946 = vmatmul.mubr.bf16.gmra.mrb[0].mxu0 %v755
        %v947 = vpop.f32.mrb[0].mxu0
        %v948 = vadd.f32 0.0, %v947
        %v949 = vpop.f32.mrb[0].mxu0
        %v950 = vpop.f32.mrb[0].mxu0
        %v951 = vpop.f32.mrb[0].mxu0
        %952 = vdwg.mxu0
        %v957 = vunpack.c.l.b16 %v710
        %v958 = vunpack.c.l.b16 %v711
        %v959 = vunpack.c.l.b16 %v712
        %v960 = vunpack.c.l.b16 %v713
        %v961 = vpack.c.b16 %v958, %v957
        %v962 = vpack.c.b16 %v960, %v959
        %965 = vmatprep.subr.bf16.mxu0 0
        %966 = vmatpush1.bf16.msra.mxu0 %v961
        %967 = vmatprep.subr.bf16.mxu0 0
        %968 = vmatpush1.bf16.msra.mxu0 %v962
        %969 = vmatprep.subr.bf16.mxu0 0
        %970 = vmatpush1.bf16.msra.mxu0 0
        %971 = vmatprep.subr.bf16.mxu0 0
        %972 = vmatpush1.bf16.msra.mxu0 0
        %973 = vmatprep.subr.bf16.mxu0 0
        %974 = vmatpush1.bf16.msra.mxu0 0
        %975 = vmatprep.subr.bf16.mxu0 0
        %976 = vmatpush1.bf16.msra.mxu0 0
        %977 = vmatprep.subr.bf16.mxu0 0
        %978 = vmatpush1.bf16.msra.mxu0 0
        %979 = vmatprep.subr.bf16.mxu0 0
        %980 = vmatpush1.bf16.msra.mxu0 0
        %981 = vmatprep.subr.bf16.mxu0 0
        %982 = vmatpush1.bf16.msra.mxu0 0
        %983 = vmatprep.subr.bf16.mxu0 0
        %984 = vmatpush1.bf16.msra.mxu0 0
        %985 = vmatprep.subr.bf16.mxu0 0
        %986 = vmatpush1.bf16.msra.mxu0 0
        %987 = vmatprep.subr.bf16.mxu0 0
        %988 = vmatpush1.bf16.msra.mxu0 0
        %989 = vmatprep.subr.bf16.mxu0 0
        %990 = vmatpush1.bf16.msra.mxu0 0
        %991 = vmatprep.subr.bf16.mxu0 0
        %992 = vmatpush1.bf16.msra.mxu0 0
        %993 = vmatprep.subr.bf16.mxu0 0
        %994 = vmatpush1.bf16.msra.mxu0 0
        %995 = vmatprep.subr.bf16.mxu0 0
        %996 = vmatpush1.bf16.msra.mxu0 0
        %997 = vmatprep.mubr.bf16.mxu0 0
        %998 = vmatmul.mubr.bf16.gmra.mrb[0].mxu0 %v755
        %v999 = vpop.f32.mrb[0].mxu0
        %v1000 = vadd.f32 0.0, %v999
        %v1001 = vpop.f32.mrb[0].mxu0
        %v1002 = vpop.f32.mrb[0].mxu0
        %v1003 = vpop.f32.mrb[0].mxu0
        %1004 = vdwg.mxu0
        %v1009 = vunpack.c.l.b16 %v714
        %v1010 = vunpack.c.l.b16 %v715
        %v1011 = vunpack.c.l.b16 %v716
        %v1012 = vunpack.c.l.b16 %v717
        %v1013 = vpack.c.b16 %v1010, %v1009
        %v1014 = vpack.c.b16 %v1012, %v1011
        %1017 = vmatprep.subr.bf16.mxu0 0
        %1018 = vmatpush1.bf16.msra.mxu0 %v1013
        %1019 = vmatprep.subr.bf16.mxu0 0
        %1020 = vmatpush1.bf16.msra.mxu0 %v1014
        %1021 = vmatprep.subr.bf16.mxu0 0
        %1022 = vmatpush1.bf16.msra.mxu0 0
        %1023 = vmatprep.subr.bf16.mxu0 0
        %1024 = vmatpush1.bf16.msra.mxu0 0
        %1025 = vmatprep.subr.bf16.mxu0 0
        %1026 = vmatpush1.bf16.msra.mxu0 0
        %1027 = vmatprep.subr.bf16.mxu0 0
        %1028 = vmatpush1.bf16.msra.mxu0 0
        %1029 = vmatprep.subr.bf16.mxu0 0
        %1030 = vmatpush1.bf16.msra.mxu0 0
        %1031 = vmatprep.subr.bf16.mxu0 0
        %1032 = vmatpush1.bf16.msra.mxu0 0
        %1033 = vmatprep.subr.bf16.mxu0 0
        %1034 = vmatpush1.bf16.msra.mxu0 0
        %1035 = vmatprep.subr.bf16.mxu0 0
        %1036 = vmatpush1.bf16.msra.mxu0 0
        %1037 = vmatprep.subr.bf16.mxu0 0
        %1038 = vmatpush1.bf16.msra.mxu0 0
        %1039 = vmatprep.subr.bf16.mxu0 0
        %1040 = vmatpush1.bf16.msra.mxu0 0
        %1041 = vmatprep.subr.bf16.mxu0 0
        %1042 = vmatpush1.bf16.msra.mxu0 0
        %1043 = vmatprep.subr.bf16.mxu0 0
        %1044 = vmatpush1.bf16.msra.mxu0 0
        %1045 = vmatprep.subr.bf16.mxu0 0
        %1046 = vmatpush1.bf16.msra.mxu0 0
        %1047 = vmatprep.subr.bf16.mxu0 0
        %1048 = vmatpush1.bf16.msra.mxu0 0
        %1049 = vmatprep.mubr.bf16.mxu0 0
        %1050 = vmatmul.mubr.bf16.gmra.mrb[0].mxu0 %v755
        %v1051 = vpop.f32.mrb[0].mxu0
        %v1052 = vadd.f32 0.0, %v1051
        %v1053 = vpop.f32.mrb[0].mxu0
        %v1054 = vpop.f32.mrb[0].mxu0
        %v1055 = vpop.f32.mrb[0].mxu0
        %1056 = vdwg.mxu0
        %v1061 = vunpack.c.l.b16 %v718
        %v1062 = vunpack.c.l.b16 %v719
        %v1063 = vunpack.c.l.b16 %v720
        %v1064 = vunpack.c.l.b16 %v721
        %v1065 = vpack.c.b16 %v1062, %v1061
        %v1066 = vpack.c.b16 %v1064, %v1063
        %1069 = vmatprep.subr.bf16.mxu0 0
        %1070 = vmatpush1.bf16.msra.mxu0 %v1065
        %1071 = vmatprep.subr.bf16.mxu0 0
        %1072 = vmatpush1.bf16.msra.mxu0 %v1066
        %1073 = vmatprep.subr.bf16.mxu0 0
        %1074 = vmatpush1.bf16.msra.mxu0 0
        %1075 = vmatprep.subr.bf16.mxu0 0
        %1076 = vmatpush1.bf16.msra.mxu0 0
        %1077 = vmatprep.subr.bf16.mxu0 0
        %1078 = vmatpush1.bf16.msra.mxu0 0
        %1079 = vmatprep.subr.bf16.mxu0 0
        %1080 = vmatpush1.bf16.msra.mxu0 0
        %1081 = vmatprep.subr.bf16.mxu0 0
        %1082 = vmatpush1.bf16.msra.mxu0 0
        %1083 = vmatprep.subr.bf16.mxu0 0
        %1084 = vmatpush1.bf16.msra.mxu0 0
        %1085 = vmatprep.subr.bf16.mxu0 0
        %1086 = vmatpush1.bf16.msra.mxu0 0
        %1087 = vmatprep.subr.bf16.mxu0 0
        %1088 = vmatpush1.bf16.msra.mxu0 0
        %1089 = vmatprep.subr.bf16.mxu0 0
        %1090 = vmatpush1.bf16.msra.mxu0 0
        %1091 = vmatprep.subr.bf16.mxu0 0
        %1092 = vmatpush1.bf16.msra.mxu0 0
        %1093 = vmatprep.subr.bf16.mxu0 0
        %1094 = vmatpush1.bf16.msra.mxu0 0
        %1095 = vmatprep.subr.bf16.mxu0 0
        %1096 = vmatpush1.bf16.msra.mxu0 0
        %1097 = vmatprep.subr.bf16.mxu0 0
        %1098 = vmatpush1.bf16.msra.mxu0 0
        %1099 = vmatprep.subr.bf16.mxu0 0
        %1100 = vmatpush1.bf16.msra.mxu0 0
        %1101 = vmatprep.mubr.bf16.mxu0 0
        %1102 = vmatmul.mubr.bf16.gmra.mrb[0].mxu0 %v755
        %v1103 = vpop.f32.mrb[0].mxu0
        %v1104 = vadd.f32 0.0, %v1103
        %v1105 = vpop.f32.mrb[0].mxu0
        %v1106 = vpop.f32.mrb[0].mxu0
        %v1107 = vpop.f32.mrb[0].mxu0
        %1108 = vdwg.mxu0
        %v1113 = vunpack.c.l.b16 %v722
        %v1114 = vunpack.c.l.b16 %v723
        %v1115 = vunpack.c.l.b16 %v724
        %v1116 = vunpack.c.l.b16 %v725
        %v1117 = vpack.c.b16 %v1114, %v1113
        %v1118 = vpack.c.b16 %v1116, %v1115
        %1121 = vmatprep.subr.bf16.mxu0 0
        %1122 = vmatpush1.bf16.msra.mxu0 %v1117
        %1123 = vmatprep.subr.bf16.mxu0 0
        %1124 = vmatpush1.bf16.msra.mxu0 %v1118
        %1125 = vmatprep.subr.bf16.mxu0 0
        %1126 = vmatpush1.bf16.msra.mxu0 0
        %1127 = vmatprep.subr.bf16.mxu0 0
        %1128 = vmatpush1.bf16.msra.mxu0 0
        %1129 = vmatprep.subr.bf16.mxu0 0
        %1130 = vmatpush1.bf16.msra.mxu0 0
        %1131 = vmatprep.subr.bf16.mxu0 0
        %1132 = vmatpush1.bf16.msra.mxu0 0
        %1133 = vmatprep.subr.bf16.mxu0 0
        %1134 = vmatpush1.bf16.msra.mxu0 0
        %1135 = vmatprep.subr.bf16.mxu0 0
        %1136 = vmatpush1.bf16.msra.mxu0 0
        %1137 = vmatprep.subr.bf16.mxu0 0
        %1138 = vmatpush1.bf16.msra.mxu0 0
        %1139 = vmatprep.subr.bf16.mxu0 0
        %1140 = vmatpush1.bf16.msra.mxu0 0
        %1141 = vmatprep.subr.bf16.mxu0 0
        %1142 = vmatpush1.bf16.msra.mxu0 0
        %1143 = vmatprep.subr.bf16.mxu0 0
        %1144 = vmatpush1.bf16.msra.mxu0 0
        %1145 = vmatprep.subr.bf16.mxu0 0
        %1146 = vmatpush1.bf16.msra.mxu0 0
        %1147 = vmatprep.subr.bf16.mxu0 0
        %1148 = vmatpush1.bf16.msra.mxu0 0
        %1149 = vmatprep.subr.bf16.mxu0 0
        %1150 = vmatpush1.bf16.msra.mxu0 0
        %1151 = vmatprep.subr.bf16.mxu0 0
        %1152 = vmatpush1.bf16.msra.mxu0 0
        %1153 = vmatprep.mubr.bf16.mxu0 0
        %1154 = vmatmul.mubr.bf16.gmra.mrb[0].mxu0 %v755
        %v1155 = vpop.f32.mrb[0].mxu0
        %v1156 = vadd.f32 0.0, %v1155
        %v1157 = vpop.f32.mrb[0].mxu0
        %v1158 = vpop.f32.mrb[0].mxu0
        %v1159 = vpop.f32.mrb[0].mxu0
        %1160 = vdwg.mxu0
        %v1165 = vunpack.c.l.b16 %v726
        %v1166 = vunpack.c.l.b16 %v727
        %v1167 = vunpack.c.l.b16 %v728
        %v1168 = vunpack.c.l.b16 %v729
        %v1169 = vpack.c.b16 %v1166, %v1165
        %v1170 = vpack.c.b16 %v1168, %v1167
        %1173 = vmatprep.subr.bf16.mxu0 0
        %1174 = vmatpush1.bf16.msra.mxu0 %v1169
        %1175 = vmatprep.subr.bf16.mxu0 0
        %1176 = vmatpush1.bf16.msra.mxu0 %v1170
        %1177 = vmatprep.subr.bf16.mxu0 0
        %1178 = vmatpush1.bf16.msra.mxu0 0
        %1179 = vmatprep.subr.bf16.mxu0 0
        %1180 = vmatpush1.bf16.msra.mxu0 0
        %1181 = vmatprep.subr.bf16.mxu0 0
        %1182 = vmatpush1.bf16.msra.mxu0 0
        %1183 = vmatprep.subr.bf16.mxu0 0
        %1184 = vmatpush1.bf16.msra.mxu0 0
        %1185 = vmatprep.subr.bf16.mxu0 0
        %1186 = vmatpush1.bf16.msra.mxu0 0
        %1187 = vmatprep.subr.bf16.mxu0 0
        %1188 = vmatpush1.bf16.msra.mxu0 0
        %1189 = vmatprep.subr.bf16.mxu0 0
        %1190 = vmatpush1.bf16.msra.mxu0 0
        %1191 = vmatprep.subr.bf16.mxu0 0
        %1192 = vmatpush1.bf16.msra.mxu0 0
        %1193 = vmatprep.subr.bf16.mxu0 0
        %1194 = vmatpush1.bf16.msra.mxu0 0
        %1195 = vmatprep.subr.bf16.mxu0 0
        %1196 = vmatpush1.bf16.msra.mxu0 0
        %1197 = vmatprep.subr.bf16.mxu0 0
        %1198 = vmatpush1.bf16.msra.mxu0 0
        %1199 = vmatprep.subr.bf16.mxu0 0
        %1200 = vmatpush1.bf16.msra.mxu0 0
        %1201 = vmatprep.subr.bf16.mxu0 0
        %1202 = vmatpush1.bf16.msra.mxu0 0
        %1203 = vmatprep.subr.bf16.mxu0 0
        %1204 = vmatpush1.bf16.msra.mxu0 0
        %1205 = vmatprep.mubr.bf16.mxu0 0
        %1206 = vmatmul.mubr.bf16.gmra.mrb[0].mxu0 %v755
        %v1207 = vpop.f32.mrb[0].mxu0
        %v1208 = vadd.f32 0.0, %v1207
        %v1209 = vpop.f32.mrb[0].mxu0
        %v1210 = vpop.f32.mrb[0].mxu0
        %v1211 = vpop.f32.mrb[0].mxu0
        %1212 = vdwg.mxu0
        %v1217 = vunpack.c.l.b16 %v730
        %v1218 = vunpack.c.l.b16 %v731
        %v1219 = vunpack.c.l.b16 %v732
        %v1220 = vunpack.c.l.b16 %v733
        %v1221 = vpack.c.b16 %v1218, %v1217
        %v1222 = vpack.c.b16 %v1220, %v1219
        %1225 = vmatprep.subr.bf16.mxu0 0
        %1226 = vmatpush1.bf16.msra.mxu0 %v1221
        %1227 = vmatprep.subr.bf16.mxu0 0
        %1228 = vmatpush1.bf16.msra.mxu0 %v1222
        %1229 = vmatprep.subr.bf16.mxu0 0
        %1230 = vmatpush1.bf16.msra.mxu0 0
        %1231 = vmatprep.subr.bf16.mxu0 0
        %1232 = vmatpush1.bf16.msra.mxu0 0
        %1233 = vmatprep.subr.bf16.mxu0 0
        %1234 = vmatpush1.bf16.msra.mxu0 0
        %1235 = vmatprep.subr.bf16.mxu0 0
        %1236 = vmatpush1.bf16.msra.mxu0 0
        %1237 = vmatprep.subr.bf16.mxu0 0
        %1238 = vmatpush1.bf16.msra.mxu0 0
        %1239 = vmatprep.subr.bf16.mxu0 0
        %1240 = vmatpush1.bf16.msra.mxu0 0
        %1241 = vmatprep.subr.bf16.mxu0 0
        %1242 = vmatpush1.bf16.msra.mxu0 0
        %1243 = vmatprep.subr.bf16.mxu0 0
        %1244 = vmatpush1.bf16.msra.mxu0 0
        %1245 = vmatprep.subr.bf16.mxu0 0
        %1246 = vmatpush1.bf16.msra.mxu0 0
        %1247 = vmatprep.subr.bf16.mxu0 0
        %1248 = vmatpush1.bf16.msra.mxu0 0
        %1249 = vmatprep.subr.bf16.mxu0 0
        %1250 = vmatpush1.bf16.msra.mxu0 0
        %1251 = vmatprep.subr.bf16.mxu0 0
        %1252 = vmatpush1.bf16.msra.mxu0 0
        %1253 = vmatprep.subr.bf16.mxu0 0
        %1254 = vmatpush1.bf16.msra.mxu0 0
        %1255 = vmatprep.subr.bf16.mxu0 0
        %1256 = vmatpush1.bf16.msra.mxu0 0
        %1257 = vmatprep.mubr.bf16.mxu0 0
        %1258 = vmatmul.mubr.bf16.gmra.mrb[0].mxu0 %v755
        %v1259 = vpop.f32.mrb[0].mxu0
        %v1260 = vadd.f32 0.0, %v1259
        %v1261 = vpop.f32.mrb[0].mxu0
        %v1262 = vpop.f32.mrb[0].mxu0
        %v1263 = vpop.f32.mrb[0].mxu0
        %1264 = vdwg.mxu0
        %v1269 = vunpack.c.l.b16 %v734
        %v1270 = vunpack.c.l.b16 %v735
        %v1271 = vunpack.c.l.b16 %v736
        %v1272 = vunpack.c.l.b16 %v737
        %v1273 = vpack.c.b16 %v1270, %v1269
        %v1274 = vpack.c.b16 %v1272, %v1271
        %1277 = vmatprep.subr.bf16.mxu0 0
        %1278 = vmatpush1.bf16.msra.mxu0 %v1273
        %1279 = vmatprep.subr.bf16.mxu0 0
        %1280 = vmatpush1.bf16.msra.mxu0 %v1274
        %1281 = vmatprep.subr.bf16.mxu0 0
        %1282 = vmatpush1.bf16.msra.mxu0 0
        %1283 = vmatprep.subr.bf16.mxu0 0
        %1284 = vmatpush1.bf16.msra.mxu0 0
        %1285 = vmatprep.subr.bf16.mxu0 0
        %1286 = vmatpush1.bf16.msra.mxu0 0
        %1287 = vmatprep.subr.bf16.mxu0 0
        %1288 = vmatpush1.bf16.msra.mxu0 0
        %1289 = vmatprep.subr.bf16.mxu0 0
        %1290 = vmatpush1.bf16.msra.mxu0 0
        %1291 = vmatprep.subr.bf16.mxu0 0
        %1292 = vmatpush1.bf16.msra.mxu0 0
        %1293 = vmatprep.subr.bf16.mxu0 0
        %1294 = vmatpush1.bf16.msra.mxu0 0
        %1295 = vmatprep.subr.bf16.mxu0 0
        %1296 = vmatpush1.bf16.msra.mxu0 0
        %1297 = vmatprep.subr.bf16.mxu0 0
        %1298 = vmatpush1.bf16.msra.mxu0 0
        %1299 = vmatprep.subr.bf16.mxu0 0
        %1300 = vmatpush1.bf16.msra.mxu0 0
        %1301 = vmatprep.subr.bf16.mxu0 0
        %1302 = vmatpush1.bf16.msra.mxu0 0
        %1303 = vmatprep.subr.bf16.mxu0 0
        %1304 = vmatpush1.bf16.msra.mxu0 0
        %1305 = vmatprep.subr.bf16.mxu0 0
        %1306 = vmatpush1.bf16.msra.mxu0 0
        %1307 = vmatprep.subr.bf16.mxu0 0
        %1308 = vmatpush1.bf16.msra.mxu0 0
        %1309 = vmatprep.mubr.bf16.mxu0 0
        %1310 = vmatmul.mubr.bf16.gmra.mrb[0].mxu0 %v755
        %v1311 = vpop.f32.mrb[0].mxu0
        %v1312 = vadd.f32 0.0, %v1311
        %v1313 = vpop.f32.mrb[0].mxu0
        %v1314 = vpop.f32.mrb[0].mxu0
        %v1315 = vpop.f32.mrb[0].mxu0
        %1316 = vdwg.mxu0
        %v1321 = vunpack.c.l.b16 %v738
        %v1322 = vunpack.c.l.b16 %v739
        %v1323 = vunpack.c.l.b16 %v740
        %v1324 = vunpack.c.l.b16 %v741
        %v1325 = vpack.c.b16 %v1322, %v1321
        %v1326 = vpack.c.b16 %v1324, %v1323
        %1329 = vmatprep.subr.bf16.mxu0 0
        %1330 = vmatpush1.bf16.msra.mxu0 %v1325
        %1331 = vmatprep.subr.bf16.mxu0 0
        %1332 = vmatpush1.bf16.msra.mxu0 %v1326
        %1333 = vmatprep.subr.bf16.mxu0 0
        %1334 = vmatpush1.bf16.msra.mxu0 0
        %1335 = vmatprep.subr.bf16.mxu0 0
        %1336 = vmatpush1.bf16.msra.mxu0 0
        %1337 = vmatprep.subr.bf16.mxu0 0
        %1338 = vmatpush1.bf16.msra.mxu0 0
        %1339 = vmatprep.subr.bf16.mxu0 0
        %1340 = vmatpush1.bf16.msra.mxu0 0
        %1341 = vmatprep.subr.bf16.mxu0 0
        %1342 = vmatpush1.bf16.msra.mxu0 0
        %1343 = vmatprep.subr.bf16.mxu0 0
        %1344 = vmatpush1.bf16.msra.mxu0 0
        %1345 = vmatprep.subr.bf16.mxu0 0
        %1346 = vmatpush1.bf16.msra.mxu0 0
        %1347 = vmatprep.subr.bf16.mxu0 0
        %1348 = vmatpush1.bf16.msra.mxu0 0
        %1349 = vmatprep.subr.bf16.mxu0 0
        %1350 = vmatpush1.bf16.msra.mxu0 0
        %1351 = vmatprep.subr.bf16.mxu0 0
        %1352 = vmatpush1.bf16.msra.mxu0 0
        %1353 = vmatprep.subr.bf16.mxu0 0
        %1354 = vmatpush1.bf16.msra.mxu0 0
        %1355 = vmatprep.subr.bf16.mxu0 0
        %1356 = vmatpush1.bf16.msra.mxu0 0
        %1357 = vmatprep.subr.bf16.mxu0 0
        %1358 = vmatpush1.bf16.msra.mxu0 0
        %1359 = vmatprep.subr.bf16.mxu0 0
        %1360 = vmatpush1.bf16.msra.mxu0 0
        %1361 = vmatprep.mubr.bf16.mxu0 0
        %1362 = vmatmul.mubr.bf16.gmra.mrb[0].mxu0 %v755
        %v1363 = vpop.f32.mrb[0].mxu0
        %v1364 = vadd.f32 0.0, %v1363
        %v1365 = vpop.f32.mrb[0].mxu0
        %v1366 = vpop.f32.mrb[0].mxu0
        %v1367 = vpop.f32.mrb[0].mxu0
        %1368 = vdwg.mxu0
        %v1369 = vpack.c.bf16 %v792, %v792
        %v1370 = vpack.c.bf16 %v844, %v844
        %v1371 = vpack.c.bf16 %v896, %v896
        %v1372 = vpack.c.bf16 %v948, %v948
        %v1373 = vpack.c.bf16 %v1000, %v1000
        %v1374 = vpack.c.bf16 %v1052, %v1052
        %v1375 = vpack.c.bf16 %v1104, %v1104
        %v1376 = vpack.c.bf16 %v1156, %v1156
        %v1377 = vpack.c.bf16 %v1208, %v1208
        %v1378 = vpack.c.bf16 %v1260, %v1260
        %v1379 = vpack.c.bf16 %v1312, %v1312
        %v1380 = vpack.c.bf16 %v1364, %v1364
        %vm1381 = vcmask 64512
        %v1383 = vsel %vm1381, %v1369, 0
        %v1386 = vsel %vm1381, %v1373, 0
        %1388 = vmatprep.subr.bf16.mxu0 0
        %1389 = vmatpush1.bf16.xpose.msra.mxu0 %v1386
        %1390 = vmatprep.subr.bf16.mxu0 0
        %1391 = vmatpush1.bf16.xpose.msra.mxu0 0
        %1392 = vmatprep.subr.bf16.mxu0 0
        %1393 = vmatpush1.bf16.xpose.msra.mxu0 0
        %1394 = vmatprep.subr.bf16.mxu0 0
        %1395 = vmatpush1.bf16.xpose.msra.mxu0 0
        %1396 = vmatprep.subr.bf16.mxu0 0
        %1397 = vmatpush1.bf16.xpose.msra.mxu0 0
        %1398 = vmatprep.subr.bf16.mxu0 0
        %1399 = vmatpush1.bf16.xpose.msra.mxu0 0
        %1400 = vmatprep.subr.bf16.mxu0 0
        %1401 = vmatpush1.bf16.xpose.msra.mxu0 0
        %1402 = vmatprep.subr.bf16.mxu0 0
        %1403 = vmatpush1.bf16.xpose.msra.mxu0 0
        %1404 = vmatprep.subr.bf16.mxu0 0
        %1405 = vmatpush1.bf16.xpose.msra.mxu0 0
        %1406 = vmatprep.subr.bf16.mxu0 0
        %1407 = vmatpush1.bf16.xpose.msra.mxu0 0
        %1408 = vmatprep.subr.bf16.mxu0 0
        %1409 = vmatpush1.bf16.xpose.msra.mxu0 0
        %1410 = vmatprep.subr.bf16.mxu0 0
        %1411 = vmatpush1.bf16.xpose.msra.mxu0 0
        %1412 = vmatprep.subr.bf16.mxu0 0
        %1413 = vmatpush1.bf16.xpose.msra.mxu0 0
        %1414 = vmatprep.subr.bf16.mxu0 0
        %1415 = vmatpush1.bf16.xpose.msra.mxu0 0
        %1416 = vmatprep.subr.bf16.mxu0 0
        %1417 = vmatpush1.bf16.xpose.msra.mxu0 0
        %1418 = vmatprep.subr.bf16.mxu0 0
        %1419 = vmatpush1.bf16.xpose.msra.mxu0 0
        %1420 = vmatprep.mubr.bf16.mxu0 0
        %1421 = vmatmul.mubr.bf16.gmra.mrb[0].mxu0 %v1383
        %v1422 = vpop.f32.mrb[0].mxu0
        %v1423 = vadd.f32 0.0, %v1422
        %v1424 = vpop.f32.mrb[0].mxu0
        %v1425 = vpop.f32.mrb[0].mxu0
        %v1426 = vpop.f32.mrb[0].mxu0
        %1427 = vdwg.mxu0
        %v1429 = vsel %vm1381, %v1370, 0
        %v1432 = vsel %vm1381, %v1374, 0
        %1434 = vmatprep.subr.bf16.mxu0 0
        %1435 = vmatpush1.bf16.xpose.msra.mxu0 %v1432
        %1436 = vmatprep.subr.bf16.mxu0 0
        %1437 = vmatpush1.bf16.xpose.msra.mxu0 0
        %1438 = vmatprep.subr.bf16.mxu0 0
        %1439 = vmatpush1.bf16.xpose.msra.mxu0 0
        %1440 = vmatprep.subr.bf16.mxu0 0
        %1441 = vmatpush1.bf16.xpose.msra.mxu0 0
        %1442 = vmatprep.subr.bf16.mxu0 0
        %1443 = vmatpush1.bf16.xpose.msra.mxu0 0
        %1444 = vmatprep.subr.bf16.mxu0 0
        %1445 = vmatpush1.bf16.xpose.msra.mxu0 0
        %1446 = vmatprep.subr.bf16.mxu0 0
        %1447 = vmatpush1.bf16.xpose.msra.mxu0 0
        %1448 = vmatprep.subr.bf16.mxu0 0
        %1449 = vmatpush1.bf16.xpose.msra.mxu0 0
        %1450 = vmatprep.subr.bf16.mxu0 0
        %1451 = vmatpush1.bf16.xpose.msra.mxu0 0
        %1452 = vmatprep.subr.bf16.mxu0 0
        %1453 = vmatpush1.bf16.xpose.msra.mxu0 0
        %1454 = vmatprep.subr.bf16.mxu0 0
        %1455 = vmatpush1.bf16.xpose.msra.mxu0 0
        %1456 = vmatprep.subr.bf16.mxu0 0
        %1457 = vmatpush1.bf16.xpose.msra.mxu0 0
        %1458 = vmatprep.subr.bf16.mxu0 0
        %1459 = vmatpush1.bf16.xpose.msra.mxu0 0
        %1460 = vmatprep.subr.bf16.mxu0 0
        %1461 = vmatpush1.bf16.xpose.msra.mxu0 0
        %1462 = vmatprep.subr.bf16.mxu0 0
        %1463 = vmatpush1.bf16.xpose.msra.mxu0 0
        %1464 = vmatprep.subr.bf16.mxu0 0
        %1465 = vmatpush1.bf16.xpose.msra.mxu0 0
        %1466 = vmatprep.mubr.bf16.mxu0 0
        %1467 = vmatmul.mubr.bf16.gmra.mrb[0].mxu0 %v1429
        %v1468 = vpop.f32.mrb[0].mxu0
        %v1469 = vadd.f32 0.0, %v1468
        %v1470 = vpop.f32.mrb[0].mxu0
        %v1471 = vpop.f32.mrb[0].mxu0
        %v1472 = vpop.f32.mrb[0].mxu0
        %1473 = vdwg.mxu0
        %v1475 = vsel %vm1381, %v1371, 0
        %v1478 = vsel %vm1381, %v1375, 0
        %1480 = vmatprep.subr.bf16.mxu0 0
        %1481 = vmatpush1.bf16.xpose.msra.mxu0 %v1478
        %1482 = vmatprep.subr.bf16.mxu0 0
        %1483 = vmatpush1.bf16.xpose.msra.mxu0 0
        %1484 = vmatprep.subr.bf16.mxu0 0
        %1485 = vmatpush1.bf16.xpose.msra.mxu0 0
        %1486 = vmatprep.subr.bf16.mxu0 0
        %1487 = vmatpush1.bf16.xpose.msra.mxu0 0
        %1488 = vmatprep.subr.bf16.mxu0 0
        %1489 = vmatpush1.bf16.xpose.msra.mxu0 0
        %1490 = vmatprep.subr.bf16.mxu0 0
        %1491 = vmatpush1.bf16.xpose.msra.mxu0 0
        %1492 = vmatprep.subr.bf16.mxu0 0
        %1493 = vmatpush1.bf16.xpose.msra.mxu0 0
        %1494 = vmatprep.subr.bf16.mxu0 0
        %1495 = vmatpush1.bf16.xpose.msra.mxu0 0
        %1496 = vmatprep.subr.bf16.mxu0 0
        %1497 = vmatpush1.bf16.xpose.msra.mxu0 0
        %1498 = vmatprep.subr.bf16.mxu0 0
        %1499 = vmatpush1.bf16.xpose.msra.mxu0 0
        %1500 = vmatprep.subr.bf16.mxu0 0
        %1501 = vmatpush1.bf16.xpose.msra.mxu0 0
        %1502 = vmatprep.subr.bf16.mxu0 0
        %1503 = vmatpush1.bf16.xpose.msra.mxu0 0
        %1504 = vmatprep.subr.bf16.mxu0 0
        %1505 = vmatpush1.bf16.xpose.msra.mxu0 0
        %1506 = vmatprep.subr.bf16.mxu0 0
        %1507 = vmatpush1.bf16.xpose.msra.mxu0 0
        %1508 = vmatprep.subr.bf16.mxu0 0
        %1509 = vmatpush1.bf16.xpose.msra.mxu0 0
        %1510 = vmatprep.subr.bf16.mxu0 0
        %1511 = vmatpush1.bf16.xpose.msra.mxu0 0
        %1512 = vmatprep.mubr.bf16.mxu0 0
        %1513 = vmatmul.mubr.bf16.gmra.mrb[0].mxu0 %v1475
        %v1514 = vpop.f32.mrb[0].mxu0
        %v1515 = vadd.f32 0.0, %v1514
        %v1516 = vpop.f32.mrb[0].mxu0
        %v1517 = vpop.f32.mrb[0].mxu0
        %v1518 = vpop.f32.mrb[0].mxu0
        %1519 = vdwg.mxu0
        %v1521 = vsel %vm1381, %v1372, 0
        %v1524 = vsel %vm1381, %v1376, 0
        %1526 = vmatprep.subr.bf16.mxu0 0
        %1527 = vmatpush1.bf16.xpose.msra.mxu0 %v1524
        %1528 = vmatprep.subr.bf16.mxu0 0
        %1529 = vmatpush1.bf16.xpose.msra.mxu0 0
        %1530 = vmatprep.subr.bf16.mxu0 0
        %1531 = vmatpush1.bf16.xpose.msra.mxu0 0
        %1532 = vmatprep.subr.bf16.mxu0 0
        %1533 = vmatpush1.bf16.xpose.msra.mxu0 0
        %1534 = vmatprep.subr.bf16.mxu0 0
        %1535 = vmatpush1.bf16.xpose.msra.mxu0 0
        %1536 = vmatprep.subr.bf16.mxu0 0
        %1537 = vmatpush1.bf16.xpose.msra.mxu0 0
        %1538 = vmatprep.subr.bf16.mxu0 0
        %1539 = vmatpush1.bf16.xpose.msra.mxu0 0
        %1540 = vmatprep.subr.bf16.mxu0 0
        %1541 = vmatpush1.bf16.xpose.msra.mxu0 0
        %1542 = vmatprep.subr.bf16.mxu0 0
        %1543 = vmatpush1.bf16.xpose.msra.mxu0 0
        %1544 = vmatprep.subr.bf16.mxu0 0
        %1545 = vmatpush1.bf16.xpose.msra.mxu0 0
        %1546 = vmatprep.subr.bf16.mxu0 0
        %1547 = vmatpush1.bf16.xpose.msra.mxu0 0
        %1548 = vmatprep.subr.bf16.mxu0 0
        %1549 = vmatpush1.bf16.xpose.msra.mxu0 0
        %1550 = vmatprep.subr.bf16.mxu0 0
        %1551 = vmatpush1.bf16.xpose.msra.mxu0 0
        %1552 = vmatprep.subr.bf16.mxu0 0
        %1553 = vmatpush1.bf16.xpose.msra.mxu0 0
        %1554 = vmatprep.subr.bf16.mxu0 0
        %1555 = vmatpush1.bf16.xpose.msra.mxu0 0
        %1556 = vmatprep.subr.bf16.mxu0 0
        %1557 = vmatpush1.bf16.xpose.msra.mxu0 0
        %1558 = vmatprep.mubr.bf16.mxu0 0
        %1559 = vmatmul.mubr.bf16.gmra.mrb[0].mxu0 %v1521
        %v1560 = vpop.f32.mrb[0].mxu0
        %v1561 = vadd.f32 0.0, %v1560
        %v1562 = vpop.f32.mrb[0].mxu0
        %v1563 = vpop.f32.mrb[0].mxu0
        %v1564 = vpop.f32.mrb[0].mxu0
        %1565 = vdwg.mxu0
        %v1566 = vsel %vm1381, %v1423, -inf
        %1567 = vmax.xlane.f32.xlu0 %v1566
        %v1568 = vpop.xlane.xlu0 %1567
        %v1569 = vsel %vm1381, %v1469, -inf
        %1570 = vmax.xlane.f32.xlu0 %v1569
        %v1571 = vpop.xlane.xlu0 %1570
        %v1572 = vsel %vm1381, %v1515, -inf
        %1573 = vmax.xlane.f32.xlu0 %v1572
        %v1574 = vpop.xlane.xlu0 %1573
        %v1575 = vsel %vm1381, %v1561, -inf
        %1576 = vmax.xlane.f32.xlu0 %v1575
        %v1577 = vpop.xlane.xlu0 %1576
        %v1578 = vsub.f32 %v1423, %v1568
        %v1579 = vsub.f32 %v1469, %v1571
        %v1580 = vsub.f32 %v1515, %v1574
        %v1581 = vsub.f32 %v1561, %v1577
        %v1582 = vmul.f32 %v1578, 1.442695
        %v1583 = vpow.pop %v1582
        %v1584 = vmul.f32 %v1579, 1.442695
        %v1585 = vpow.pop %v1584
        %v1586 = vmul.f32 %v1580, 1.442695
        %v1587 = vpow.pop %v1586
        %v1588 = vmul.f32 %v1581, 1.442695
        %v1589 = vpow.pop %v1588
        %v1590 = vsel %vm1381, %v1583, 0.0
        %1591 = vadd.xlane.f32.xlu0 %v1590
        %v1592 = vpop.xlane.xlu0 %1591
        %v1593 = vsel %vm1381, %v1585, 0.0
        %1594 = vadd.xlane.f32.xlu0 %v1593
        %v1595 = vpop.xlane.xlu0 %1594
        %v1596 = vsel %vm1381, %v1587, 0.0
        %1597 = vadd.xlane.f32.xlu0 %v1596
        %v1598 = vpop.xlane.xlu0 %1597
        %v1599 = vsel %vm1381, %v1589, 0.0
        %1600 = vadd.xlane.f32.xlu0 %v1599
        %v1601 = vpop.xlane.xlu0 %1600
        %v1602 = vrcp.pop %v1592
        %v1603 = vrcp.pop %v1595
        %v1604 = vrcp.pop %v1598
        %v1605 = vrcp.pop %v1601
        %v1606 = vmul.f32 %v1583, %v1602
        %v1607 = vmul.f32 %v1585, %v1603
        %v1608 = vmul.f32 %v1587, %v1604
        %v1609 = vmul.f32 %v1589, %v1605
        %v1610 = vpack.c.bf16 %v1606, %v1606
        %v1611 = vpack.c.bf16 %v1607, %v1607
        %v1612 = vpack.c.bf16 %v1608, %v1608
        %v1613 = vpack.c.bf16 %v1609, %v1609
        %v1615 = vsel %vm1381, %v1610, 0
        %vm1617 = vcmask 1043456
        %v1619 = vsel %vm1617, %v1377, 0
        %1621 = vmatprep.subr.bf16.mxu0 0
        %1622 = vmatpush1.bf16.msra.mxu0 %v1619
        %1623 = vmatprep.subr.bf16.mxu0 0
        %1624 = vmatpush1.bf16.msra.mxu0 0
        %1625 = vmatprep.subr.bf16.mxu0 0
        %1626 = vmatpush1.bf16.msra.mxu0 0
        %1627 = vmatprep.subr.bf16.mxu0 0
        %1628 = vmatpush1.bf16.msra.mxu0 0
        %1629 = vmatprep.subr.bf16.mxu0 0
        %1630 = vmatpush1.bf16.msra.mxu0 0
        %1631 = vmatprep.subr.bf16.mxu0 0
        %1632 = vmatpush1.bf16.msra.mxu0 0
        %1633 = vmatprep.subr.bf16.mxu0 0
        %1634 = vmatpush1.bf16.msra.mxu0 0
        %1635 = vmatprep.subr.bf16.mxu0 0
        %1636 = vmatpush1.bf16.msra.mxu0 0
        %1637 = vmatprep.subr.bf16.mxu0 0
        %1638 = vmatpush1.bf16.msra.mxu0 0
        %1639 = vmatprep.subr.bf16.mxu0 0
        %1640 = vmatpush1.bf16.msra.mxu0 0
        %1641 = vmatprep.subr.bf16.mxu0 0
        %1642 = vmatpush1.bf16.msra.mxu0 0
        %1643 = vmatprep.subr.bf16.mxu0 0
        %1644 = vmatpush1.bf16.msra.mxu0 0
        %1645 = vmatprep.subr.bf16.mxu0 0
        %1646 = vmatpush1.bf16.msra.mxu0 0
        %1647 = vmatprep.subr.bf16.mxu0 0
        %1648 = vmatpush1.bf16.msra.mxu0 0
        %1649 = vmatprep.subr.bf16.mxu0 0
        %1650 = vmatpush1.bf16.msra.mxu0 0
        %1651 = vmatprep.subr.bf16.mxu0 0
        %1652 = vmatpush1.bf16.msra.mxu0 0
        %1653 = vmatprep.mubr.bf16.mxu0 0
        %1654 = vmatmul.mubr.bf16.gmra.mrb[0].mxu0 %v1615
        %v1655 = vpop.f32.mrb[0].mxu0
        %v1656 = vadd.f32 0.0, %v1655
        %v1657 = vpop.f32.mrb[0].mxu0
        %v1658 = vpop.f32.mrb[0].mxu0
        %v1659 = vpop.f32.mrb[0].mxu0
        %1660 = vdwg.mxu0
        %v1662 = vsel %vm1381, %v1611, 0
        %v1665 = vsel %vm1617, %v1378, 0
        %1667 = vmatprep.subr.bf16.mxu0 0
        %1668 = vmatpush1.bf16.msra.mxu0 %v1665
        %1669 = vmatprep.subr.bf16.mxu0 0
        %1670 = vmatpush1.bf16.msra.mxu0 0
        %1671 = vmatprep.subr.bf16.mxu0 0
        %1672 = vmatpush1.bf16.msra.mxu0 0
        %1673 = vmatprep.subr.bf16.mxu0 0
        %1674 = vmatpush1.bf16.msra.mxu0 0
        %1675 = vmatprep.subr.bf16.mxu0 0
        %1676 = vmatpush1.bf16.msra.mxu0 0
        %1677 = vmatprep.subr.bf16.mxu0 0
        %1678 = vmatpush1.bf16.msra.mxu0 0
        %1679 = vmatprep.subr.bf16.mxu0 0
        %1680 = vmatpush1.bf16.msra.mxu0 0
        %1681 = vmatprep.subr.bf16.mxu0 0
        %1682 = vmatpush1.bf16.msra.mxu0 0
        %1683 = vmatprep.subr.bf16.mxu0 0
        %1684 = vmatpush1.bf16.msra.mxu0 0
        %1685 = vmatprep.subr.bf16.mxu0 0
        %1686 = vmatpush1.bf16.msra.mxu0 0
        %1687 = vmatprep.subr.bf16.mxu0 0
        %1688 = vmatpush1.bf16.msra.mxu0 0
        %1689 = vmatprep.subr.bf16.mxu0 0
        %1690 = vmatpush1.bf16.msra.mxu0 0
        %1691 = vmatprep.subr.bf16.mxu0 0
        %1692 = vmatpush1.bf16.msra.mxu0 0
        %1693 = vmatprep.subr.bf16.mxu0 0
        %1694 = vmatpush1.bf16.msra.mxu0 0
        %1695 = vmatprep.subr.bf16.mxu0 0
        %1696 = vmatpush1.bf16.msra.mxu0 0
        %1697 = vmatprep.subr.bf16.mxu0 0
        %1698 = vmatpush1.bf16.msra.mxu0 0
        %1699 = vmatprep.mubr.bf16.mxu0 0
        %1700 = vmatmul.mubr.bf16.gmra.mrb[0].mxu0 %v1662
        %v1701 = vpop.f32.mrb[0].mxu0
        %v1702 = vadd.f32 0.0, %v1701
        %v1703 = vpop.f32.mrb[0].mxu0
        %v1704 = vpop.f32.mrb[0].mxu0
        %v1705 = vpop.f32.mrb[0].mxu0
        %1706 = vdwg.mxu0
        %v1708 = vsel %vm1381, %v1612, 0
        %v1711 = vsel %vm1617, %v1379, 0
        %1713 = vmatprep.subr.bf16.mxu0 0
        %1714 = vmatpush1.bf16.msra.mxu0 %v1711
        %1715 = vmatprep.subr.bf16.mxu0 0
        %1716 = vmatpush1.bf16.msra.mxu0 0
        %1717 = vmatprep.subr.bf16.mxu0 0
        %1718 = vmatpush1.bf16.msra.mxu0 0
        %1719 = vmatprep.subr.bf16.mxu0 0
        %1720 = vmatpush1.bf16.msra.mxu0 0
        %1721 = vmatprep.subr.bf16.mxu0 0
        %1722 = vmatpush1.bf16.msra.mxu0 0
        %1723 = vmatprep.subr.bf16.mxu0 0
        %1724 = vmatpush1.bf16.msra.mxu0 0
        %1725 = vmatprep.subr.bf16.mxu0 0
        %1726 = vmatpush1.bf16.msra.mxu0 0
        %1727 = vmatprep.subr.bf16.mxu0 0
        %1728 = vmatpush1.bf16.msra.mxu0 0
        %1729 = vmatprep.subr.bf16.mxu0 0
        %1730 = vmatpush1.bf16.msra.mxu0 0
        %1731 = vmatprep.subr.bf16.mxu0 0
        %1732 = vmatpush1.bf16.msra.mxu0 0
        %1733 = vmatprep.subr.bf16.mxu0 0
        %1734 = vmatpush1.bf16.msra.mxu0 0
        %1735 = vmatprep.subr.bf16.mxu0 0
        %1736 = vmatpush1.bf16.msra.mxu0 0
        %1737 = vmatprep.subr.bf16.mxu0 0
        %1738 = vmatpush1.bf16.msra.mxu0 0
        %1739 = vmatprep.subr.bf16.mxu0 0
        %1740 = vmatpush1.bf16.msra.mxu0 0
        %1741 = vmatprep.subr.bf16.mxu0 0
        %1742 = vmatpush1.bf16.msra.mxu0 0
        %1743 = vmatprep.subr.bf16.mxu0 0
        %1744 = vmatpush1.bf16.msra.mxu0 0
        %1745 = vmatprep.mubr.bf16.mxu0 0
        %1746 = vmatmul.mubr.bf16.gmra.mrb[0].mxu0 %v1708
        %v1747 = vpop.f32.mrb[0].mxu0
        %v1748 = vadd.f32 0.0, %v1747
        %v1749 = vpop.f32.mrb[0].mxu0
        %v1750 = vpop.f32.mrb[0].mxu0
        %v1751 = vpop.f32.mrb[0].mxu0
        %1752 = vdwg.mxu0
        %v1754 = vsel %vm1381, %v1613, 0
        %v1757 = vsel %vm1617, %v1380, 0
        %1759 = vmatprep.subr.bf16.mxu0 0
        %1760 = vmatpush1.bf16.msra.mxu0 %v1757
        %1761 = vmatprep.subr.bf16.mxu0 0
        %1762 = vmatpush1.bf16.msra.mxu0 0
        %1763 = vmatprep.subr.bf16.mxu0 0
        %1764 = vmatpush1.bf16.msra.mxu0 0
        %1765 = vmatprep.subr.bf16.mxu0 0
        %1766 = vmatpush1.bf16.msra.mxu0 0
        %1767 = vmatprep.subr.bf16.mxu0 0
        %1768 = vmatpush1.bf16.msra.mxu0 0
        %1769 = vmatprep.subr.bf16.mxu0 0
        %1770 = vmatpush1.bf16.msra.mxu0 0
        %1771 = vmatprep.subr.bf16.mxu0 0
        %1772 = vmatpush1.bf16.msra.mxu0 0
        %1773 = vmatprep.subr.bf16.mxu0 0
        %1774 = vmatpush1.bf16.msra.mxu0 0
        %1775 = vmatprep.subr.bf16.mxu0 0
        %1776 = vmatpush1.bf16.msra.mxu0 0
        %1777 = vmatprep.subr.bf16.mxu0 0
        %1778 = vmatpush1.bf16.msra.mxu0 0
        %1779 = vmatprep.subr.bf16.mxu0 0
        %1780 = vmatpush1.bf16.msra.mxu0 0
        %1781 = vmatprep.subr.bf16.mxu0 0
        %1782 = vmatpush1.bf16.msra.mxu0 0
        %1783 = vmatprep.subr.bf16.mxu0 0
        %1784 = vmatpush1.bf16.msra.mxu0 0
        %1785 = vmatprep.subr.bf16.mxu0 0
        %1786 = vmatpush1.bf16.msra.mxu0 0
        %1787 = vmatprep.subr.bf16.mxu0 0
        %1788 = vmatpush1.bf16.msra.mxu0 0
        %1789 = vmatprep.subr.bf16.mxu0 0
        %1790 = vmatpush1.bf16.msra.mxu0 0
        %1791 = vmatprep.mubr.bf16.mxu0 0
        %1792 = vmatmul.mubr.bf16.gmra.mrb[0].mxu0 %v1754
        %v1793 = vpop.f32.mrb[0].mxu0
        %v1794 = vadd.f32 0.0, %v1793
        %v1795 = vpop.f32.mrb[0].mxu0
        %v1796 = vpop.f32.mrb[0].mxu0
        %v1797 = vpop.f32.mrb[0].mxu0
        %1798 = vdwg.mxu0
        %v1799 = vpack.c.bf16 %v1656, %v1656
        %v1800 = vpack.c.bf16 %v1702, %v1702
        %v1801 = vpack.c.bf16 %v1748, %v1748
        %v1802 = vpack.c.bf16 %v1794, %v1794
        %v1803 = vld [vmem:[%s627] sm:$0xf]
        %v1804 = vld [vmem:[%s627 + $0x4] sm:$0xf]
        %v1805 = vld [vmem:[%s627 + $0x8] sm:$0xf]
        %v1806 = vld [vmem:[%s627 + $0xc] sm:$0xf]
        %v1808 = vsel %vm1381, %v1799, 0
        %v1811 = vsel %vm1617, %v1803, 0
        %1813 = vmatprep.subr.bf16.mxu0 0
        %1814 = vmatpush1.bf16.msra.mxu0 %v1811
        %1815 = vmatprep.subr.bf16.mxu0 0
        %1816 = vmatpush1.bf16.msra.mxu0 0
        %1817 = vmatprep.subr.bf16.mxu0 0
        %1818 = vmatpush1.bf16.msra.mxu0 0
        %1819 = vmatprep.subr.bf16.mxu0 0
        %1820 = vmatpush1.bf16.msra.mxu0 0
        %1821 = vmatprep.subr.bf16.mxu0 0
        %1822 = vmatpush1.bf16.msra.mxu0 0
        %1823 = vmatprep.subr.bf16.mxu0 0
        %1824 = vmatpush1.bf16.msra.mxu0 0
        %1825 = vmatprep.subr.bf16.mxu0 0
        %1826 = vmatpush1.bf16.msra.mxu0 0
        %1827 = vmatprep.subr.bf16.mxu0 0
        %1828 = vmatpush1.bf16.msra.mxu0 0
        %1829 = vmatprep.subr.bf16.mxu0 0
        %1830 = vmatpush1.bf16.msra.mxu0 0
        %1831 = vmatprep.subr.bf16.mxu0 0
        %1832 = vmatpush1.bf16.msra.mxu0 0
        %1833 = vmatprep.subr.bf16.mxu0 0
        %1834 = vmatpush1.bf16.msra.mxu0 0
        %1835 = vmatprep.subr.bf16.mxu0 0
        %1836 = vmatpush1.bf16.msra.mxu0 0
        %1837 = vmatprep.subr.bf16.mxu0 0
        %1838 = vmatpush1.bf16.msra.mxu0 0
        %1839 = vmatprep.subr.bf16.mxu0 0
        %1840 = vmatpush1.bf16.msra.mxu0 0
        %1841 = vmatprep.subr.bf16.mxu0 0
        %1842 = vmatpush1.bf16.msra.mxu0 0
        %1843 = vmatprep.subr.bf16.mxu0 0
        %1844 = vmatpush1.bf16.msra.mxu0 0
        %1845 = vmatprep.mubr.bf16.mxu0 0
        %1846 = vmatmul.mubr.bf16.gmra.mrb[0].mxu0 %v1808
        %v1847 = vpop.f32.mrb[0].mxu0
        %v1848 = vadd.f32 0.0, %v1847
        %v1849 = vpop.f32.mrb[0].mxu0
        %v1850 = vpop.f32.mrb[0].mxu0
        %v1851 = vpop.f32.mrb[0].mxu0
        %1852 = vdwg.mxu0
        %v1854 = vsel %vm1381, %v1800, 0
        %v1857 = vsel %vm1617, %v1804, 0
        %1859 = vmatprep.subr.bf16.mxu0 0
        %1860 = vmatpush1.bf16.msra.mxu0 %v1857
        %1861 = vmatprep.subr.bf16.mxu0 0
        %1862 = vmatpush1.bf16.msra.mxu0 0
        %1863 = vmatprep.subr.bf16.mxu0 0
        %1864 = vmatpush1.bf16.msra.mxu0 0
        %1865 = vmatprep.subr.bf16.mxu0 0
        %1866 = vmatpush1.bf16.msra.mxu0 0
        %1867 = vmatprep.subr.bf16.mxu0 0
        %1868 = vmatpush1.bf16.msra.mxu0 0
        %1869 = vmatprep.subr.bf16.mxu0 0
        %1870 = vmatpush1.bf16.msra.mxu0 0
        %1871 = vmatprep.subr.bf16.mxu0 0
        %1872 = vmatpush1.bf16.msra.mxu0 0
        %1873 = vmatprep.subr.bf16.mxu0 0
        %1874 = vmatpush1.bf16.msra.mxu0 0
        %1875 = vmatprep.subr.bf16.mxu0 0
        %1876 = vmatpush1.bf16.msra.mxu0 0
        %1877 = vmatprep.subr.bf16.mxu0 0
        %1878 = vmatpush1.bf16.msra.mxu0 0
        %1879 = vmatprep.subr.bf16.mxu0 0
        %1880 = vmatpush1.bf16.msra.mxu0 0
        %1881 = vmatprep.subr.bf16.mxu0 0
        %1882 = vmatpush1.bf16.msra.mxu0 0
        %1883 = vmatprep.subr.bf16.mxu0 0
        %1884 = vmatpush1.bf16.msra.mxu0 0
        %1885 = vmatprep.subr.bf16.mxu0 0
        %1886 = vmatpush1.bf16.msra.mxu0 0
        %1887 = vmatprep.subr.bf16.mxu0 0
        %1888 = vmatpush1.bf16.msra.mxu0 0
        %1889 = vmatprep.subr.bf16.mxu0 0
        %1890 = vmatpush1.bf16.msra.mxu0 0
        %1891 = vmatprep.mubr.bf16.mxu0 0
        %1892 = vmatmul.mubr.bf16.gmra.mrb[0].mxu0 %v1854
        %v1893 = vpop.f32.mrb[0].mxu0
        %v1894 = vadd.f32 0.0, %v1893
        %v1895 = vpop.f32.mrb[0].mxu0
        %v1896 = vpop.f32.mrb[0].mxu0
        %v1897 = vpop.f32.mrb[0].mxu0
        %1898 = vdwg.mxu0
        %v1900 = vsel %vm1381, %v1801, 0
        %v1903 = vsel %vm1617, %v1805, 0
        %1905 = vmatprep.subr.bf16.mxu0 0
        %1906 = vmatpush1.bf16.msra.mxu0 %v1903
        %1907 = vmatprep.subr.bf16.mxu0 0
        %1908 = vmatpush1.bf16.msra.mxu0 0
        %1909 = vmatprep.subr.bf16.mxu0 0
        %1910 = vmatpush1.bf16.msra.mxu0 0
        %1911 = vmatprep.subr.bf16.mxu0 0
        %1912 = vmatpush1.bf16.msra.mxu0 0
        %1913 = vmatprep.subr.bf16.mxu0 0
        %1914 = vmatpush1.bf16.msra.mxu0 0
        %1915 = vmatprep.subr.bf16.mxu0 0
        %1916 = vmatpush1.bf16.msra.mxu0 0
        %1917 = vmatprep.subr.bf16.mxu0 0
        %1918 = vmatpush1.bf16.msra.mxu0 0
        %1919 = vmatprep.subr.bf16.mxu0 0
        %1920 = vmatpush1.bf16.msra.mxu0 0
        %1921 = vmatprep.subr.bf16.mxu0 0
        %1922 = vmatpush1.bf16.msra.mxu0 0
        %1923 = vmatprep.subr.bf16.mxu0 0
        %1924 = vmatpush1.bf16.msra.mxu0 0
        %1925 = vmatprep.subr.bf16.mxu0 0
        %1926 = vmatpush1.bf16.msra.mxu0 0
        %1927 = vmatprep.subr.bf16.mxu0 0
        %1928 = vmatpush1.bf16.msra.mxu0 0
        %1929 = vmatprep.subr.bf16.mxu0 0
        %1930 = vmatpush1.bf16.msra.mxu0 0
        %1931 = vmatprep.subr.bf16.mxu0 0
        %1932 = vmatpush1.bf16.msra.mxu0 0
        %1933 = vmatprep.subr.bf16.mxu0 0
        %1934 = vmatpush1.bf16.msra.mxu0 0
        %1935 = vmatprep.subr.bf16.mxu0 0
        %1936 = vmatpush1.bf16.msra.mxu0 0
        %1937 = vmatprep.mubr.bf16.mxu0 0
        %1938 = vmatmul.mubr.bf16.gmra.mrb[0].mxu0 %v1900
        %v1939 = vpop.f32.mrb[0].mxu0
        %v1940 = vadd.f32 0.0, %v1939
        %v1941 = vpop.f32.mrb[0].mxu0
        %v1942 = vpop.f32.mrb[0].mxu0
        %v1943 = vpop.f32.mrb[0].mxu0
        %1944 = vdwg.mxu0
        %v1946 = vsel %vm1381, %v1802, 0
        %v1949 = vsel %vm1617, %v1806, 0
        %1951 = vmatprep.subr.bf16.mxu0 0
        %1952 = vmatpush1.bf16.msra.mxu0 %v1949
        %1953 = vmatprep.subr.bf16.mxu0 0
        %1954 = vmatpush1.bf16.msra.mxu0 0
        %1955 = vmatprep.subr.bf16.mxu0 0
        %1956 = vmatpush1.bf16.msra.mxu0 0
        %1957 = vmatprep.subr.bf16.mxu0 0
        %1958 = vmatpush1.bf16.msra.mxu0 0
        %1959 = vmatprep.subr.bf16.mxu0 0
        %1960 = vmatpush1.bf16.msra.mxu0 0
        %1961 = vmatprep.subr.bf16.mxu0 0
        %1962 = vmatpush1.bf16.msra.mxu0 0
        %1963 = vmatprep.subr.bf16.mxu0 0
        %1964 = vmatpush1.bf16.msra.mxu0 0
        %1965 = vmatprep.subr.bf16.mxu0 0
        %1966 = vmatpush1.bf16.msra.mxu0 0
        %1967 = vmatprep.subr.bf16.mxu0 0
        %1968 = vmatpush1.bf16.msra.mxu0 0
        %1969 = vmatprep.subr.bf16.mxu0 0
        %1970 = vmatpush1.bf16.msra.mxu0 0
        %1971 = vmatprep.subr.bf16.mxu0 0
        %1972 = vmatpush1.bf16.msra.mxu0 0
        %1973 = vmatprep.subr.bf16.mxu0 0
        %1974 = vmatpush1.bf16.msra.mxu0 0
        %1975 = vmatprep.subr.bf16.mxu0 0
        %1976 = vmatpush1.bf16.msra.mxu0 0
        %1977 = vmatprep.subr.bf16.mxu0 0
        %1978 = vmatpush1.bf16.msra.mxu0 0
        %1979 = vmatprep.subr.bf16.mxu0 0
        %1980 = vmatpush1.bf16.msra.mxu0 0
        %1981 = vmatprep.subr.bf16.mxu0 0
        %1982 = vmatpush1.bf16.msra.mxu0 0
        %1983 = vmatprep.mubr.bf16.mxu0 0
        %1984 = vmatmul.mubr.bf16.gmra.mrb[0].mxu0 %v1946
        %v1985 = vpop.f32.mrb[0].mxu0
        %v1986 = vadd.f32 0.0, %v1985
        %v1987 = vpop.f32.mrb[0].mxu0
        %v1988 = vpop.f32.mrb[0].mxu0
        %v1989 = vpop.f32.mrb[0].mxu0
        %1990 = vdwg.mxu0
        %v1991 = vsel %vm664, %v1848, 0.0
        %v1992 = vsel %vm664, %v1894, 0.0
        %v1993 = vadd.f32 %v1991, %v1992
        %v1994 = vsel %vm664, %v1940, 0.0
        %v1995 = vadd.f32 %v1993, %v1994
        %v1996 = vsel %vm664, %v1986, 0.0
        %v1997 = vadd.f32 %v1995, %v1996
        %v1998 = vld [vmem:[%s630] sm:$0x1]
        %v2000 = vlaneseq
        %v2001 = vshrl.u32 %v2000, 7
        %v2002 = vsub.s32 0, %v2001
        %v2003 = vrot.slane %v1998, %v2002
        %v2005 = vadd.f32 %v1997, %v2003
        %v2006 = vadd.f32 %v2005, %v661
        %v2007 = vld [vmem:[%s633] sm:$0x1]
        %v2008 = vld [vmem:[%s636] sm:$0x1]
        %v2009 = vsel %vm664, %v2006, 0.0
        %2010 = vadd.xlane.f32.xlu0 %v2009
        %v2011 = vpop.xlane.xlu0 %2010
        %v2012 = vmul.f32 %v2011, %v668
        %v2013 = vsub.f32 %v2006, %v2012
        %v2014 = vmul.f32 %v2013, %v2013
        %v2015 = vsel %vm664, %v2014, 0.0
        %2016 = vadd.xlane.f32.xlu0 %v2015
        %v2017 = vpop.xlane.xlu0 %2016
        %v2018 = vmul.f32 %v2017, %v668
        %v2019 = vadd.f32 %v2018, 1e-05
        %v2020 = vrsqrt.pop %v2019
        %v2021 = vmul.f32 %v2013, %v2020
        %v2023 = vlaneseq
        %v2024 = vshrl.u32 %v2023, 7
        %v2025 = vsub.s32 0, %v2024
        %v2026 = vrot.slane %v2007, %v2025
        %v2028 = vmul.f32 %v2021, %v2026
        %v2030 = vlaneseq
        %v2031 = vshrl.u32 %v2030, 7
        %v2032 = vsub.s32 0, %v2031
        %v2033 = vrot.slane %v2008, %v2032
        %v2035 = vadd.f32 %v2028, %v2033
        %v2036 = vpack.c.bf16 %v2035, %v2035
        %v2037 = vld [vmem:[%s641] sm:$0xf]
        %v2038 = vld [vmem:[%s641 + $0x4] sm:$0xf]
        %v2039 = vld [vmem:[%s641 + $0x8] sm:$0xf]
        %v2040 = vld [vmem:[%s641 + $0xc] sm:$0xf]
        %v2041 = vld [vmem:[%s644] sm:$0x1]
        %v2043 = vlaneseq
        %v2044 = vshrl.u32 %v2043, 7
        %v2045 = vsub.s32 0, %v2044
        %v2046 = vrot.slane %v2041, %v2045
        %v2052 = vunpack.c.l.b16 %v2037
        %v2053 = vunpack.c.l.b16 %v2038
        %v2054 = vunpack.c.l.b16 %v2039
        %v2055 = vunpack.c.l.b16 %v2040
        %v2056 = vpack.c.b16 %v2053, %v2052
        %v2057 = vpack.c.b16 %v2055, %v2054
        %v2061 = vsel %vm664, %v2036, 0
        %2063 = vmatprep.subr.bf16.mxu0 0
        %2064 = vmatpush1.bf16.msra.mxu0 %v2056
        %2065 = vmatprep.subr.bf16.mxu0 0
        %2066 = vmatpush1.bf16.msra.mxu0 %v2057
        %2067 = vmatprep.subr.bf16.mxu0 0
        %2068 = vmatpush1.bf16.msra.mxu0 0
        %2069 = vmatprep.subr.bf16.mxu0 0
        %2070 = vmatpush1.bf16.msra.mxu0 0
        %2071 = vmatprep.subr.bf16.mxu0 0
        %2072 = vmatpush1.bf16.msra.mxu0 0
        %2073 = vmatprep.subr.bf16.mxu0 0
        %2074 = vmatpush1.bf16.msra.mxu0 0
        %2075 = vmatprep.subr.bf16.mxu0 0
        %2076 = vmatpush1.bf16.msra.mxu0 0
        %2077 = vmatprep.subr.bf16.mxu0 0
        %2078 = vmatpush1.bf16.msra.mxu0 0
        %2079 = vmatprep.subr.bf16.mxu0 0
        %2080 = vmatpush1.bf16.msra.mxu0 0
        %2081 = vmatprep.subr.bf16.mxu0 0
        %2082 = vmatpush1.bf16.msra.mxu0 0
        %2083 = vmatprep.subr.bf16.mxu0 0
        %2084 = vmatpush1.bf16.msra.mxu0 0
        %2085 = vmatprep.subr.bf16.mxu0 0
        %2086 = vmatpush1.bf16.msra.mxu0 0
        %2087 = vmatprep.subr.bf16.mxu0 0
        %2088 = vmatpush1.bf16.msra.mxu0 0
        %2089 = vmatprep.subr.bf16.mxu0 0
        %2090 = vmatpush1.bf16.msra.mxu0 0
        %2091 = vmatprep.subr.bf16.mxu0 0
        %2092 = vmatpush1.bf16.msra.mxu0 0
        %2093 = vmatprep.subr.bf16.mxu0 0
        %2094 = vmatpush1.bf16.msra.mxu0 0
        %2095 = vmatprep.mubr.bf16.mxu0 0
        %2096 = vmatmul.mubr.bf16.gmra.mrb[0].mxu0 %v2061
        %v2097 = vpop.f32.mrb[0].mxu0
        %v2098 = vadd.f32 %v2046, %v2097
        %v2099 = vpop.f32.mrb[0].mxu0
        %v2100 = vpop.f32.mrb[0].mxu0
        %v2101 = vpop.f32.mrb[0].mxu0
        %2102 = vdwg.mxu0
        %v2103 = vmul.f32 %v2098, 0.5
        %v2104 = vmul.f32 %v2098, 0.70710677
        %v2105 = verf.f32.pop %v2104
        %v2106 = vadd.f32 %v2105, 1.0
        %v2107 = vmul.f32 %v2103, %v2106
        %v2108 = vpack.c.bf16 %v2107, %v2107
        %v2109 = vld [vmem:[%s649] sm:$0xf]
        %v2110 = vld [vmem:[%s649 + $0x4] sm:$0xf]
        %v2111 = vld [vmem:[%s649 + $0x8] sm:$0xf]
        %v2112 = vld [vmem:[%s649 + $0xc] sm:$0xf]
        %v2113 = vld [vmem:[%s649 + $0x10] sm:$0xf]
        %v2114 = vld [vmem:[%s649 + $0x14] sm:$0xf]
        %v2115 = vld [vmem:[%s649 + $0x18] sm:$0xf]
        %v2116 = vld [vmem:[%s649 + $0x1c] sm:$0xf]
        %v2117 = vld [vmem:[%s652] sm:$0x1]
        %v2119 = vlaneseq
        %v2120 = vshrl.u32 %v2119, 7
        %v2121 = vsub.s32 0, %v2120
        %v2122 = vrot.slane %v2117, %v2121
        %v2132 = vunpack.c.l.b16 %v2109
        %v2133 = vunpack.c.l.b16 %v2110
        %v2134 = vunpack.c.l.b16 %v2111
        %v2135 = vunpack.c.l.b16 %v2112
        %v2136 = vunpack.c.l.b16 %v2113
        %v2137 = vunpack.c.l.b16 %v2114
        %v2138 = vunpack.c.l.b16 %v2115
        %v2139 = vunpack.c.l.b16 %v2116
        %v2140 = vpack.c.b16 %v2133, %v2132
        %v2141 = vpack.c.b16 %v2135, %v2134
        %v2142 = vpack.c.b16 %v2137, %v2136
        %v2143 = vpack.c.b16 %v2139, %v2138
        %vm2148 = vcmask 523264
        %v2150 = vsel %vm2148, %v2108, 0
        %2152 = vmatprep.subr.bf16.mxu0 0
        %2153 = vmatpush1.bf16.msra.mxu0 %v2140
        %2154 = vmatprep.subr.bf16.mxu0 0
        %2155 = vmatpush1.bf16.msra.mxu0 %v2141
        %2156 = vmatprep.subr.bf16.mxu0 0
        %2157 = vmatpush1.bf16.msra.mxu0 %v2142
        %2158 = vmatprep.subr.bf16.mxu0 0
        %2159 = vmatpush1.bf16.msra.mxu0 %v2143
        %2160 = vmatprep.subr.bf16.mxu0 0
        %2161 = vmatpush1.bf16.msra.mxu0 0
        %2162 = vmatprep.subr.bf16.mxu0 0
        %2163 = vmatpush1.bf16.msra.mxu0 0
        %2164 = vmatprep.subr.bf16.mxu0 0
        %2165 = vmatpush1.bf16.msra.mxu0 0
        %2166 = vmatprep.subr.bf16.mxu0 0
        %2167 = vmatpush1.bf16.msra.mxu0 0
        %2168 = vmatprep.subr.bf16.mxu0 0
        %2169 = vmatpush1.bf16.msra.mxu0 0
        %2170 = vmatprep.subr.bf16.mxu0 0
        %2171 = vmatpush1.bf16.msra.mxu0 0
        %2172 = vmatprep.subr.bf16.mxu0 0
        %2173 = vmatpush1.bf16.msra.mxu0 0
        %2174 = vmatprep.subr.bf16.mxu0 0
        %2175 = vmatpush1.bf16.msra.mxu0 0
        %2176 = vmatprep.subr.bf16.mxu0 0
        %2177 = vmatpush1.bf16.msra.mxu0 0
        %2178 = vmatprep.subr.bf16.mxu0 0
        %2179 = vmatpush1.bf16.msra.mxu0 0
        %2180 = vmatprep.subr.bf16.mxu0 0
        %2181 = vmatpush1.bf16.msra.mxu0 0
        %2182 = vmatprep.subr.bf16.mxu0 0
        %2183 = vmatpush1.bf16.msra.mxu0 0
        %2184 = vmatprep.mubr.bf16.mxu0 0
        %2185 = vmatmul.mubr.bf16.gmra.mrb[0].mxu0 %v2150
        %v2186 = vpop.f32.mrb[0].mxu0
        %v2187 = vadd.f32 %v2122, %v2186
        %v2188 = vpop.f32.mrb[0].mxu0
        %v2189 = vpop.f32.mrb[0].mxu0
        %v2190 = vpop.f32.mrb[0].mxu0
        %2191 = vdwg.mxu0
        %v2192 = vadd.f32 %v2187, %v2006
        %2193 = vst.msk [vmem:[#allocation2] sm:$0xff] %vm664, %v2192
        %p2194 = scmp.eq.s32.totalorder %s33, 1
        // Predicated region
        $region81: #{tpu_custom_call.1} parent=75 // pred_check
          %p2195 = pneg %p2194
        $region82: #{tpu_custom_call.1} parent=75 // pred_check_branch
          %2197 = sbr.rel (%p2195) target = $region84
        $region83: #{tpu_custom_call.1} parent=75 // pred_region
          %v2198 = vld [vmem:[%s12] sm:$0x1]
          %v2199 = vld [vmem:[%s13] sm:$0x1]
          %v2200 = vsel %vm664, %v2192, 0.0
          %2201 = vadd.xlane.f32.xlu0 %v2200
          %v2202 = vpop.xlane.xlu0 %2201
          %v2203 = vmul.f32 %v2202, %v668
          %v2204 = vsub.f32 %v2192, %v2203
          %v2205 = vmul.f32 %v2204, %v2204
          %v2206 = vsel %vm664, %v2205, 0.0
          %2207 = vadd.xlane.f32.xlu0 %v2206
          %v2208 = vpop.xlane.xlu0 %2207
          %v2209 = vmul.f32 %v2208, %v668
          %v2210 = vadd.f32 %v2209, 1e-05
          %v2211 = vrsqrt.pop %v2210
          %v2212 = vmul.f32 %v2204, %v2211
          %v2214 = vlaneseq
          %v2215 = vshrl.u32 %v2214, 7
          %v2216 = vsub.s32 0, %v2215
          %v2217 = vrot.slane %v2198, %v2216
          %v2219 = vmul.f32 %v2212, %v2217
          %v2221 = vlaneseq
          %v2222 = vshrl.u32 %v2221, 7
          %v2223 = vsub.s32 0, %v2222
          %v2224 = vrot.slane %v2199, %v2223
          %v2226 = vadd.f32 %v2219, %v2224
          %2227 = vst.msk [vmem:[%s607] sm:$0xff] %vm664, %v2226
        $region84: #{tpu_custom_call.1} parent=75 // pred_fallthru
          _
        %s2228 = sand.u32 %s402, 1
        %s2229 = scalar_lea.sflag [#allocation4], %s2228
        %s2230 = sand.u32 %s402, 1
        %s2231 = smul.addr %s2230, 8
        %s2232 = scalar_lea.vmem [#allocation3], %s2231
        // Predicated region
        $region85: #{tpu_custom_call.1} parent=75 // pred_check
          %p2233 = pneg %p412
        $region86: #{tpu_custom_call.1} parent=75 // pred_check_branch
          %2235 = sbr.rel (%p2233) target = $region88
        $region87: #{tpu_custom_call.1} parent=75 // pred_region
          %s2237 = ssub.s32 128, 128
          %2238 = vsyncadd %s2229, %s2237
          %s2239 = smul.addr %s32, 128
          %s2240 = scalar_lea.hbm %s14, %s2239
          %s2242 = sshll.u32 %s2232, 4
          %s2243 = int_to_ptr.vmem [resolvable:$true] %s2242
          %2245 = dma.vmem_to_hbm [thread:$0]  %s2243, 128, %s2240, %s2229
        $region88: #{tpu_custom_call.1} parent=75 // pred_fallthru
          _
      $region76: #{tpu_custom_call.1} parent=5 // pred_fallthru
        _
      %p2246 = scmp.le.s32.totalorder 2, %s23
      // Predicated region
      $region89: #{tpu_custom_call.1} parent=5 // pred_check
        %p2247 = pneg %p2246
      $region90: #{tpu_custom_call.1} parent=5 // pred_check_branch
        %2249 = sbr.rel (%p2247) target = $region92
      $region91: #{tpu_custom_call.1} parent=5 // pred_region
        %s2250 = ssub.s32 %s23, 2
        // Predicated region
        $region93: #{tpu_custom_call.1} parent=91 // pred_check
          %p2251 = pneg %p418
        $region94: #{tpu_custom_call.1} parent=91 // pred_check_branch
          %2253 = sbr.rel (%p2251) target = $region96
        $region95: #{tpu_custom_call.1} parent=91 // pred_region
          %s2254 = sand.u32 %s403, 1
          %s2255 = scalar_lea.sflag [#allocation4], %s2254
          %s2256 = sand.u32 %s403, 1
          %s2257 = smul.addr %s2256, 8
          %s2258 = scalar_lea.vmem [#allocation3], %s2257
          %2259 = dma.done %s2255, 128
        $region96: #{tpu_custom_call.1} parent=91 // pred_fallthru
          _
      $region92: #{tpu_custom_call.1} parent=5 // pred_fallthru
        _
    $region6: #{tpu_custom_call.1} parent=1 // loop_footer
      %s27 = sadd.s32 1, %s23
    $region7: #{tpu_custom_call.1} parent=1 // loop_footer_branch
      %22 = sbr.rel target = $region3
    $region8: #{tpu_custom_call.1} parent=1 // loop_exit
      _
    %2260 = vsyncpa [#allocation4], 1
    %s2261 = scalar_lea.sflag [#allocation4], 1
    %2262 = vsyncpa %s2261, 1

</llo_original>
